<compile_context>
chip_gen: v6e
topology: v6e:2x2x1
jax: 0.10.0
libtpu: 0.0.40
codegen_flags: <defaults>
</compile_context>

<pallas_src>
import functools
import math

import numpy as np
import jax
import jax.numpy as jnp
from jax.experimental import pallas as pl
from jax.experimental.pallas import tpu as pltpu


# ----------------------------------------------------------------------------
# generation-aware sizing
# ----------------------------------------------------------------------------
def _tpu_vmem_capacity_bytes():
    try:
        cap = int(getattr(pltpu.get_tpu_info(), "vmem_capacity_bytes", 0))
        if cap > 0:
            return cap
    except Exception:
        pass
    return 128 * 1024 * 1024            # v5e / v6e default


_VMEM_CAP = _tpu_vmem_capacity_bytes()
# ~50% of physical VMEM (leaves headroom on v7x's 64 MiB, generous on 128 MiB parts).
_VMEM_LIMIT = max(16 * 1024 * 1024, min(int(_VMEM_CAP * 0.5), 96 * 1024 * 1024))
# Bigger tiles amortize per-grid-step overhead on 128 MiB parts, smaller on v7x.
_ROW_TARGET = 1024 if _VMEM_CAP >= 96 * 1024 * 1024 else 512


# ----------------------------------------------------------------------------
# tiling helpers
# ----------------------------------------------------------------------------
def _pick_group_batch(nG, N, target_rows):
    """Groups per attention step: gb | nG, gb*N sublane-aligned, <= target_rows,
    and leaving >= 2 grid steps where possible (v7x megacore)."""
    divs = [d for d in range(1, nG + 1) if nG % d == 0]
    cands = [d for d in divs if (d * N) % 8 == 0 and d * N <= target_rows]
    if not cands:
        cands = [d for d in divs if (d * N) % 8 == 0]
    if not cands:
        return nG                                   # full-extent block is always legal
    gb = max(cands)
    if nG // gb < 2:
        smaller = [d for d in cands if nG // d >= 2 and d * N >= 64]
        if smaller:
            gb = max(smaller)
    return gb


def _pick_row_tile(M, target):
    """MLP row tile: multiple of 8 dividing M, <= target, >= 2 grid steps."""
    if M <= 16 or M % 8 != 0:
        return M                                    # tiny / awkward M: single step
    cap = min(target, M // 2)
    cap -= cap % 8
    cap = max(cap, 8)
    for d in range(cap, 7, -8):
        if M % d == 0:
            return d
    return 8


# ----------------------------------------------------------------------------
# Pallas kernels
# ----------------------------------------------------------------------------
def _attn_kernel(x_ref, ln_g_ref, ln_b_ref, qkvw_ref, qkvb_ref, pw_ref, pb_ref,
                 bias_ref, o_ref, *, num_heads, head_dim, gb, n_tok):
    """GB groups per step: LN1 -> qkv -> head-batched MHSA -> single projection."""
    C = num_heads * head_dim
    rows = gb * n_tok

    # LayerNorm1 (f32 statistics on the bf16 row tile).
    x = x_ref[...].astype(jnp.float32)                           # (rows, C)
    mu = jnp.mean(x, axis=-1, keepdims=True)
    xc = x - mu
    var = jnp.mean(xc * xc, axis=-1, keepdims=True)
    xn = xc * jax.lax.rsqrt(var + 1e-5) * ln_g_ref[...] + ln_b_ref[...]

    # One big-M (rows, C) @ (C, 3C) matmul; 1/sqrt(head_dim) pre-folded into
    # the q columns of weight and bias.  bf16 operands, f32 accumulation.
    qkv = jnp.dot(xn.astype(jnp.bfloat16), qkvw_ref[...],
                  preferred_element_type=jnp.float32) + qkvb_ref[...]   # (rows, 3C)
    qkv = qkv.astype(jnp.bfloat16)

    # Heads stacked along the leading batch axis -> (nH*gb, N, hd) so both
    # attention einsums run as ONE batched MXU stream (no per-head matmuls).
    def to_head_batch(base):
        parts = [qkv[:, base + h * head_dim: base + (h + 1) * head_dim]
                 .reshape(gb, n_tok, head_dim) for h in range(num_heads)]
        return jnp.concatenate(parts, axis=0)                    # head-major batch

    q = to_head_batch(0)
    k = to_head_batch(C)
    v = to_head_batch(2 * C)

    s = jnp.einsum('bqd,bkd->bqk', q, k,
                   preferred_element_type=jnp.float32)           # (nH*gb, N, N) f32
    s = s.reshape(num_heads, gb, n_tok, n_tok) + bias_ref[...][:, None, :, :]
    s = s - jnp.max(s, axis=-1, keepdims=True)
    e = jnp.exp(s)
    p = e * pl.reciprocal(jnp.sum(e, axis=-1, keepdims=True), approx=True)
    p = p.reshape(num_heads * gb, n_tok, n_tok).astype(jnp.bfloat16)

    o = jnp.einsum('bqk,bkd->bqd', p, v,
                   preferred_element_type=jnp.float32)           # (nH*gb, N, hd)
    o = o.astype(jnp.bfloat16)

    # Merge heads back to (rows, C) and run ONE full-C projection matmul
    # (replaces nH K=head_dim matmuls + per-head accumulator read-modify-writes).
    o_all = jnp.concatenate(
        [o[h * gb:(h + 1) * gb].reshape(rows, head_dim) for h in range(num_heads)],
        axis=-1)                                                  # (rows, C) bf16
    y = jnp.dot(o_all, pw_ref[...], preferred_element_type=jnp.float32) + pb_ref[...]
    o_ref[...] = y.astype(o_ref.dtype)                            # bf16 out (half HBM)


def _mlp_kernel(xs_ref, xa_ref, ln_g_ref, ln_b_ref, w1_ref, b1_ref, w2_ref, b2_ref,
                o_ref):
    """Fused: x = shortcut + attn;  out = x + fc2(GELU(fc1(LN2(x))))."""
    x = xs_ref[...] + xa_ref[...].astype(jnp.float32)            # attention residual
    mu = jnp.mean(x, axis=-1, keepdims=True)
    xc = x - mu
    var = jnp.mean(xc * xc, axis=-1, keepdims=True)
    xn = xc * jax.lax.rsqrt(var + 1e-5) * ln_g_ref[...] + ln_b_ref[...]

    h = jnp.dot(xn.astype(jnp.bfloat16), w1_ref[...],
                preferred_element_type=jnp.float32) + b1_ref[...]
    # exact-erf GELU to match PyTorch nn.GELU (tanh-approx would be cheaper on v5e).
    h = 0.5 * h * (1.0 + jax.lax.erf(h * (1.0 / math.sqrt(2.0))))
    y = jnp.dot(h.astype(jnp.bfloat16), w2_ref[...],
                preferred_element_type=jnp.float32) + b2_ref[...]
    o_ref[...] = x + y                                           # MLP residual, f32


# ----------------------------------------------------------------------------
# Pallas wrappers
# ----------------------------------------------------------------------------
def attention_pallas(xg2d, rel_bias, pp, nG, N):
    rows_total, C = xg2d.shape
    nH = rel_bias.shape[0]
    hd = C // nH
    gb = _pick_group_batch(nG, N, _ROW_TARGET)
    rows = gb * N
    kernel = functools.partial(_attn_kernel, num_heads=nH, head_dim=hd, gb=gb, n_tok=N)
    return pl.pallas_call(
        kernel,
        out_shape=jax.ShapeDtypeStruct((rows_total, C), jnp.bfloat16),
        grid=(nG // gb,),
        in_specs=[
            pl.BlockSpec((rows, C), lambda g: (g, 0)),           # grouped rows (bf16)
            pl.BlockSpec((1, C), lambda g: (0, 0)),              # ln1 gamma
            pl.BlockSpec((1, C), lambda g: (0, 0)),              # ln1 beta
            pl.BlockSpec((C, 3 * C), lambda g: (0, 0)),          # qkv weight (bf16)
            pl.BlockSpec((1, 3 * C), lambda g: (0, 0)),          # qkv bias
            pl.BlockSpec((C, C), lambda g: (0, 0)),              # proj weight (bf16)
            pl.BlockSpec((1, C), lambda g: (0, 0)),              # proj bias
            pl.BlockSpec((nH, N, N), lambda g: (0, 0, 0)),       # rel pos bias
        ],
        out_specs=pl.BlockSpec((rows, C), lambda g: (g, 0)),
        compiler_params=pltpu.CompilerParams(
            dimension_semantics=("parallel",),
            vmem_limit_bytes=_VMEM_LIMIT),
    )(xg2d, pp["ln1_g"], pp["ln1_b"], pp["qkv_w"], pp["qkv_b"],
      pp["proj_w"], pp["proj_b"], rel_bias)


def mlp_pallas(shortcut2d, attn2d, pp):
    M, C = shortcut2d.shape
    Hd = pp["fc1_w"].shape[1]
    tm = _pick_row_tile(M, _ROW_TARGET)
    return pl.pallas_call(
        _mlp_kernel,
        out_shape=jax.ShapeDtypeStruct((M, C), jnp.float32),
        grid=(M // tm,),
        in_specs=[
            pl.BlockSpec((tm, C), lambda i: (i, 0)),             # shortcut rows (f32)
            pl.BlockSpec((tm, C), lambda i: (i, 0)),             # attention rows (bf16)
            pl.BlockSpec((1, C), lambda i: (0, 0)),              # ln2 gamma
            pl.BlockSpec((1, C), lambda i: (0, 0)),              # ln2 beta
            pl.BlockSpec((C, Hd), lambda i: (0, 0)),             # fc1 w (bf16)
            pl.BlockSpec((1, Hd), lambda i: (0, 0)),             # fc1 b
            pl.BlockSpec((Hd, C), lambda i: (0, 0)),             # fc2 w (bf16)
            pl.BlockSpec((1, C), lambda i: (0, 0)),              # fc2 b
        ],
        out_specs=pl.BlockSpec((tm, C), lambda i: (i, 0)),
        compiler_params=pltpu.CompilerParams(
            dimension_semantics=("parallel",),
            vmem_limit_bytes=_VMEM_LIMIT),
    )(shortcut2d, attn2d, pp["ln2_g"], pp["ln2_b"],
      pp["fc1_w"], pp["fc1_b"], pp["fc2_w"], pp["fc2_b"])


# ----------------------------------------------------------------------------
# DynamicPosBias (tiny MLP, residual=False) + relative position index (JAX glue)
# ----------------------------------------------------------------------------
def _layernorm(x, g, b, eps=1e-5):
    mu = x.mean(-1, keepdims=True)
    v = ((x - mu) ** 2).mean(-1, keepdims=True)
    return (x - mu) / jnp.sqrt(v + eps) * g + b


def dyn_pos_bias(biases, p):
    x = biases @ p["pos_proj_w"].T + p["pos_proj_b"]
    for i in (1, 2, 3):
        x = jax.nn.relu(_layernorm(x, p[f"pos{i}_ln_g"], p[f"pos{i}_ln_b"]))
        x = x @ p[f"pos{i}_w"].T + p[f"pos{i}_b"]
    return x                                                     # ((2G-1)^2, nH)


@functools.lru_cache(maxsize=None)
def _bias_tables_np(G):
    h = np.arange(1 - G, G)
    w = np.arange(1 - G, G)
    b = np.stack(np.meshgrid(h, w, indexing="ij"))               # (2, 2G-1, 2G-1)
    biases = b.reshape(2, -1).T.astype(np.float32)               # ((2G-1)^2, 2)

    coords = np.stack(np.meshgrid(np.arange(G), np.arange(G), indexing="ij"))
    cf = coords.reshape(2, -1)
    rel = cf[:, :, None] - cf[:, None, :]
    rel = rel.transpose(1, 2, 0).copy()
    rel[:, :, 0] += G - 1
    rel[:, :, 1] += G - 1
    rel[:, :, 0] *= 2 * G - 1
    rpi = rel.sum(-1).astype(np.int32)                           # (G^2, G^2)
    return biases, rpi


def make_bias_tables(G):
    biases, rpi = _bias_tables_np(int(G))
    return jnp.asarray(biases), jnp.asarray(rpi)


# ----------------------------------------------------------------------------
# Parameter prep (layout / dtype changes, scale folded into q weights)
# ----------------------------------------------------------------------------
def prep_block_params(p, C, nH):
    hd = C // nH
    scale = hd ** (-0.5)
    qmul = jnp.concatenate([jnp.full((C,), scale, jnp.float32),
                            jnp.ones((2 * C,), jnp.float32)])
    Hd = p["fc1_w"].shape[0]
    return {
        "ln1_g": p["ln1_g"].reshape(1, C), "ln1_b": p["ln1_b"].reshape(1, C),
        "qkv_w": (p["qkv_w"].T * qmul[None, :]).astype(jnp.bfloat16),    # (C, 3C)
        "qkv_b": (p["qkv_b"] * qmul).reshape(1, 3 * C),
        "proj_w": p["proj_w"].T.astype(jnp.bfloat16),                    # (C, C)
        "proj_b": p["proj_b"].reshape(1, C),
        "ln2_g": p["ln2_g"].reshape(1, C), "ln2_b": p["ln2_b"].reshape(1, C),
        "fc1_w": p["fc1_w"].T.astype(jnp.bfloat16),                      # (C, Hd)
        "fc1_b": p["fc1_b"].reshape(1, Hd),
        "fc2_w": p["fc2_w"].T.astype(jnp.bfloat16),                      # (Hd, C)
        "fc2_b": p["fc2_b"].reshape(1, C),
    }


# ----------------------------------------------------------------------------
# Stage / CrossFormerBlock forward (eval mode: dropout / drop_path are identity)
# ----------------------------------------------------------------------------
def block_forward(x, p, pp, H, W, G, lsda, nH, biases, rpi):
    B, L, C = x.shape
    N = G * G
    nG = B * (H // G) * (W // G)
    shortcut2d = x.reshape(B * L, C)                             # f32 residual stream

    # group partition (SDA / LSDA) — XLA strided copy, on bf16 (half the bytes).
    # TODO(synk): absorb SDA partition into a BlockSpec index_map over the
    # (B,H//G,G,W//G,G,C) view and LSDA into an in-kernel strided-DMA gather.
    xg = x.astype(jnp.bfloat16).reshape(B, H, W, C)
    if lsda == 0:
        xg = xg.reshape(B, H // G, G, W // G, G, C).transpose(0, 1, 3, 2, 4, 5)
    else:
        xg = xg.reshape(B, G, H // G, G, W // G, C).transpose(0, 2, 4, 1, 3, 5)
    xg2d = xg.reshape(nG * N, C)

    pos = dyn_pos_bias(biases, p)                                # ((2G-1)^2, nH)
    rel_bias = pos[rpi.reshape(-1)].reshape(N, N, nH).transpose(2, 0, 1)

    attn = attention_pallas(xg2d, rel_bias, pp, nG, N)           # (nG*N, C) bf16

    # group reverse — XLA strided copy, on bf16.
    xr = attn.reshape(B, H // G, W // G, G, G, C)
    if lsda == 0:
        xr = xr.transpose(0, 1, 3, 2, 4, 5)
    else:
        xr = xr.transpose(0, 3, 1, 4, 2, 5)
    attn2d = xr.reshape(B * L, C)

    # residual + LN2 + MLP + residual fused in one Pallas kernel (f32 out).
    out = mlp_pallas(shortcut2d, attn2d, pp)
    return out.reshape(B, L, C)


def stage_forward(x, block_params, input_resolution, group_size, num_heads):
    H, W = input_resolution
    G = group_size if min(H, W) > group_size else min(H, W)
    biases, rpi = make_bias_tables(G)
    B, L, C = x.shape
    prepped = [prep_block_params(p, C, num_heads) for p in block_params]
    for i, (p, pp) in enumerate(zip(block_params, prepped)):
        lsda = 0 if (i % 2 == 0 or min(H, W) <= group_size) else 1
        x = block_forward(x, p, pp, H, W, G, lsda, num_heads, biases, rpi)
    # TODO(synk): downsample=None in this Stage instance (no PatchMerging translated).
    return x


# ----------------------------------------------------------------------------
# Deterministic parameter init (shapes follow the PyTorch module's __init__)
# ----------------------------------------------------------------------------
def init_block_params(key, C, nH, hidden):
    pos_dim = (C // 4) // 4
    ks = jax.random.split(key, 8)

    def w(k, shape):
        return jax.random.normal(k, shape, jnp.float32) * 0.02

    p = {
        "ln1_g": jnp.ones((C,), jnp.float32), "ln1_b": jnp.zeros((C,), jnp.float32),
        "qkv_w": w(ks[0], (3 * C, C)), "qkv_b": jnp.zeros((3 * C,), jnp.float32),
        "proj_w": w(ks[1], (C, C)), "proj_b": jnp.zeros((C,), jnp.float32),
        "ln2_g": jnp.ones((C,), jnp.float32), "ln2_b": jnp.zeros((C,), jnp.float32),
        "fc1_w": w(ks[2], (hidden, C)), "fc1_b": jnp.zeros((hidden,), jnp.float32),
        "fc2_w": w(ks[3], (C, hidden)), "fc2_b": jnp.zeros((C,), jnp.float32),
        "pos_proj_w": w(ks[4], (pos_dim, 2)), "pos_proj_b": jnp.zeros((pos_dim,), jnp.float32),
        "pos3_w": w(ks[7], (nH, pos_dim)), "pos3_b": jnp.zeros((nH,), jnp.float32),
    }
    for i, kk in ((1, ks[5]), (2, ks[6])):
        p[f"pos{i}_ln_g"] = jnp.ones((pos_dim,), jnp.float32)
        p[f"pos{i}_ln_b"] = jnp.zeros((pos_dim,), jnp.float32)
        p[f"pos{i}_w"] = w(kk, (pos_dim, pos_dim))
        p[f"pos{i}_b"] = jnp.zeros((pos_dim,), jnp.float32)
    p["pos3_ln_g"] = jnp.ones((pos_dim,), jnp.float32)
    p["pos3_ln_b"] = jnp.zeros((pos_dim,), jnp.float32)
    return p


# ----------------------------------------------------------------------------
if __name__ == "__main__":
    # Stage config (small but consistent with the module):
    B, C = 2, 32
    H, W = 8, 8                 # input_resolution, L = 64
    depth = 2                   # blocks alternate lsda_flag 0 / 1
    num_heads = 2               # head_dim = 16
    group_size = 4              # G = 4, N = 16 tokens per group
    mlp_ratio = 4.0
    hidden = int(C * mlp_ratio)

    key = jax.random.PRNGKey(0)
    kx, kp = jax.random.split(key)
    x = jax.random.normal(kx, (B, H * W, C), jnp.float32)        # (B, L, C)

    block_keys = jax.random.split(kp, depth)
    block_params = [init_block_params(block_keys[i], C, num_heads, hidden)
                    for i in range(depth)]

    fwd = jax.jit(functools.partial(stage_forward,
                                    input_resolution=(H, W),
                                    group_size=group_size,
                                    num_heads=num_heads))
    out = jax.block_until_ready(fwd(x, block_params))
    assert out.shape == (B, H * W, C)
    print("KERNEL_OK")
</pallas_src>

<mosaic_0001>
module attributes {stable_mosaic.version = 11 : i64} {
  func.func @_attn_kernel(%arg0: i32, %arg1: memref<64x32xbf16, #tpu.memory_space<vmem>>, %arg2: memref<1x32xf32, #tpu.memory_space<vmem>>, %arg3: memref<1x32xf32, #tpu.memory_space<vmem>>, %arg4: memref<32x96xbf16, #tpu.memory_space<vmem>>, %arg5: memref<1x96xf32, #tpu.memory_space<vmem>>, %arg6: memref<32x32xbf16, #tpu.memory_space<vmem>>, %arg7: memref<1x32xf32, #tpu.memory_space<vmem>>, %arg8: memref<2x16x16xf32, #tpu.memory_space<vmem>>, %arg9: memref<64x32xbf16, #tpu.memory_space<vmem>>) attributes {dimension_semantics = [#tpu.dimension_semantics<parallel>], iteration_bounds = array<i64: 2>, scalar_prefetch = 0 : i64, scratch_operands = 0 : i64, tpu.core_type = #tpu.core_type<tc>, window_params = [{transform_indices = @transform_0, window_bounds = array<i64: 64, 32>}, {pipeline_mode = #tpu.pipeline_mode<synchronous>, transform_indices = @transform_1, window_bounds = array<i64: 1, 32>}, {pipeline_mode = #tpu.pipeline_mode<synchronous>, transform_indices = @transform_2, window_bounds = array<i64: 1, 32>}, {pipeline_mode = #tpu.pipeline_mode<synchronous>, transform_indices = @transform_3, window_bounds = array<i64: 32, 96>}, {pipeline_mode = #tpu.pipeline_mode<synchronous>, transform_indices = @transform_4, window_bounds = array<i64: 1, 96>}, {pipeline_mode = #tpu.pipeline_mode<synchronous>, transform_indices = @transform_5, window_bounds = array<i64: 32, 32>}, {pipeline_mode = #tpu.pipeline_mode<synchronous>, transform_indices = @transform_6, window_bounds = array<i64: 1, 32>}, {pipeline_mode = #tpu.pipeline_mode<synchronous>, transform_indices = @transform_7, window_bounds = array<i64: 2, 16, 16>}, {transform_indices = @transform_8, window_bounds = array<i64: 64, 32>}]} {
    %c0 = arith.constant 0 : index
    %c0_0 = arith.constant 0 : index
    %0 = vector.load %arg1[%c0, %c0_0] : memref<64x32xbf16, #tpu.memory_space<vmem>>, vector<64x32xbf16>
    %1 = arith.extf %0 : vector<64x32xbf16> to vector<64x32xf32>
    %cst = arith.constant dense<0.000000e+00> : vector<64xf32>
    %2 = vector.multi_reduction <add>, %1, %cst [1] : vector<64x32xf32> to vector<64xf32>
    %3 = vector.shape_cast %2 : vector<64xf32> to vector<64x1xf32>
    %cst_1 = arith.constant 3.200000e+01 : f32
    %4 = vector.broadcast %cst_1 : f32 to vector<64x1xf32>
    %5 = arith.divf %3, %4 : vector<64x1xf32>
    %6 = vector.broadcast %5 : vector<64x1xf32> to vector<64x32xf32>
    %7 = arith.subf %1, %6 : vector<64x32xf32>
    %8 = arith.mulf %7, %7 : vector<64x32xf32>
    %cst_2 = arith.constant dense<0.000000e+00> : vector<64xf32>
    %9 = vector.multi_reduction <add>, %8, %cst_2 [1] : vector<64x32xf32> to vector<64xf32>
    %10 = vector.shape_cast %9 : vector<64xf32> to vector<64x1xf32>
    %cst_3 = arith.constant 3.200000e+01 : f32
    %11 = vector.broadcast %cst_3 : f32 to vector<64x1xf32>
    %12 = arith.divf %10, %11 : vector<64x1xf32>
    %cst_4 = arith.constant 9.99999974E-6 : f32
    %13 = vector.broadcast %cst_4 : f32 to vector<64x1xf32>
    %14 = arith.addf %12, %13 : vector<64x1xf32>
    %15 = math.rsqrt %14 : vector<64x1xf32>
    %16 = vector.broadcast %15 : vector<64x1xf32> to vector<64x32xf32>
    %17 = arith.mulf %7, %16 : vector<64x32xf32>
    %c0_5 = arith.constant 0 : index
    %c0_6 = arith.constant 0 : index
    %18 = vector.load %arg2[%c0_5, %c0_6] : memref<1x32xf32, #tpu.memory_space<vmem>>, vector<1x32xf32>
    %19 = vector.broadcast %18 : vector<1x32xf32> to vector<64x32xf32>
    %20 = arith.mulf %17, %19 : vector<64x32xf32>
    %c0_7 = arith.constant 0 : index
    %c0_8 = arith.constant 0 : index
    %21 = vector.load %arg3[%c0_7, %c0_8] : memref<1x32xf32, #tpu.memory_space<vmem>>, vector<1x32xf32>
    %22 = vector.broadcast %21 : vector<1x32xf32> to vector<64x32xf32>
    %23 = arith.addf %20, %22 : vector<64x32xf32>
    %24 = arith.truncf %23 : vector<64x32xf32> to vector<64x32xbf16>
    %c0_9 = arith.constant 0 : index
    %c0_10 = arith.constant 0 : index
    %25 = vector.load %arg4[%c0_9, %c0_10] : memref<32x96xbf16, #tpu.memory_space<vmem>>, vector<32x96xbf16>
    %cst_11 = arith.constant dense<0.000000e+00> : vector<64x96xf32>
    %26 = tpu.matmul %24, %25, %cst_11 {dimension_numbers = #tpu.dot_dimension_numbers<[1], [0], [0], [1], [0, 0, 1, 1], [], []>} : vector<64x32xbf16>, vector<32x96xbf16>, vector<64x96xf32> -> vector<64x96xf32>
    %c0_12 = arith.constant 0 : index
    %c0_13 = arith.constant 0 : index
    %27 = vector.load %arg5[%c0_12, %c0_13] : memref<1x96xf32, #tpu.memory_space<vmem>>, vector<1x96xf32>
    %28 = vector.broadcast %27 : vector<1x96xf32> to vector<64x96xf32>
    %29 = arith.addf %26, %28 : vector<64x96xf32>
    %30 = arith.truncf %29 : vector<64x96xf32> to vector<64x96xbf16>
    %31 = vector.extract_strided_slice %30 {offsets = [0, 0], sizes = [64, 16], strides = [1, 1]} : vector<64x96xbf16> to vector<64x16xbf16>
    %32 = vector.shape_cast %31 : vector<64x16xbf16> to vector<4x16x16xbf16>
    %33 = vector.extract_strided_slice %30 {offsets = [0, 16], sizes = [64, 16], strides = [1, 1]} : vector<64x96xbf16> to vector<64x16xbf16>
    %34 = vector.shape_cast %33 : vector<64x16xbf16> to vector<4x16x16xbf16>
    %35 = tpu.concatenate %32, %34 in 0 : vector<4x16x16xbf16>, vector<4x16x16xbf16> -> vector<8x16x16xbf16>
    %36 = vector.extract_strided_slice %30 {offsets = [0, 32], sizes = [64, 16], strides = [1, 1]} : vector<64x96xbf16> to vector<64x16xbf16>
    %37 = vector.shape_cast %36 : vector<64x16xbf16> to vector<4x16x16xbf16>
    %38 = vector.extract_strided_slice %30 {offsets = [0, 48], sizes = [64, 16], strides = [1, 1]} : vector<64x96xbf16> to vector<64x16xbf16>
    %39 = vector.shape_cast %38 : vector<64x16xbf16> to vector<4x16x16xbf16>
    %40 = tpu.concatenate %37, %39 in 0 : vector<4x16x16xbf16>, vector<4x16x16xbf16> -> vector<8x16x16xbf16>
    %41 = vector.extract_strided_slice %30 {offsets = [0, 64], sizes = [64, 16], strides = [1, 1]} : vector<64x96xbf16> to vector<64x16xbf16>
    %42 = vector.shape_cast %41 : vector<64x16xbf16> to vector<4x16x16xbf16>
    %43 = vector.extract_strided_slice %30 {offsets = [0, 80], sizes = [64, 16], strides = [1, 1]} : vector<64x96xbf16> to vector<64x16xbf16>
    %44 = vector.shape_cast %43 : vector<64x16xbf16> to vector<4x16x16xbf16>
    %45 = tpu.concatenate %42, %44 in 0 : vector<4x16x16xbf16>, vector<4x16x16xbf16> -> vector<8x16x16xbf16>
    "tpu.trace_start"() <{level = 10 : i32, message = "bqd,bkd->bqk"}> : () -> ()
    %cst_14 = arith.constant dense<0.000000e+00> : vector<8x16x16xf32>
    %46 = tpu.matmul %35, %40, %cst_14 {dimension_numbers = #tpu.dot_dimension_numbers<[2], [2], [1], [1], [0, 0, 0, 1, 1, 1], [0], [0]>} : vector<8x16x16xbf16>, vector<8x16x16xbf16>, vector<8x16x16xf32> -> vector<8x16x16xf32>
    "tpu.trace_stop"() : () -> ()
    %47 = vector.shape_cast %46 : vector<8x16x16xf32> to vector<2x4x16x16xf32>
    %c0_15 = arith.constant 0 : index
    %c0_16 = arith.constant 0 : index
    %c0_17 = arith.constant 0 : index
    %48 = vector.load %arg8[%c0_15, %c0_16, %c0_17] : memref<2x16x16xf32, #tpu.memory_space<vmem>>, vector<2x16x16xf32>
    %49 = vector.shape_cast %48 : vector<2x16x16xf32> to vector<2x1x16x16xf32>
    %50 = vector.broadcast %49 : vector<2x1x16x16xf32> to vector<2x4x16x16xf32>
    %51 = arith.addf %47, %50 : vector<2x4x16x16xf32>
    %cst_18 = arith.constant dense<0xFF800000> : vector<2x4x16xf32>
    %52 = vector.multi_reduction <maximumf>, %51, %cst_18 [3] : vector<2x4x16x16xf32> to vector<2x4x16xf32>
    %53 = vector.shape_cast %52 : vector<2x4x16xf32> to vector<2x4x16x1xf32>
    %54 = vector.broadcast %53 : vector<2x4x16x1xf32> to vector<2x4x16x16xf32>
    %55 = arith.subf %51, %54 : vector<2x4x16x16xf32>
    %56 = math.exp %55 : vector<2x4x16x16xf32>
    %cst_19 = arith.constant dense<0.000000e+00> : vector<2x4x16xf32>
    %57 = vector.multi_reduction <add>, %56, %cst_19 [3] : vector<2x4x16x16xf32> to vector<2x4x16xf32>
    %58 = vector.shape_cast %57 : vector<2x4x16xf32> to vector<2x4x16x1xf32>
    %59 = tpu.reciprocal %58 {approx = true} : vector<2x4x16x1xf32> -> vector<2x4x16x1xf32>
    %60 = vector.broadcast %59 : vector<2x4x16x1xf32> to vector<2x4x16x16xf32>
    %61 = arith.mulf %56, %60 : vector<2x4x16x16xf32>
    %62 = vector.shape_cast %61 : vector<2x4x16x16xf32> to vector<8x16x16xf32>
    %63 = arith.truncf %62 : vector<8x16x16xf32> to vector<8x16x16xbf16>
    "tpu.trace_start"() <{level = 10 : i32, message = "bqk,bkd->bqd"}> : () -> ()
    %cst_20 = arith.constant dense<0.000000e+00> : vector<8x16x16xf32>
    %64 = tpu.matmul %63, %45, %cst_20 {dimension_numbers = #tpu.dot_dimension_numbers<[2], [1], [1], [2], [0, 0, 0, 1, 1, 2], [0], [0]>} : vector<8x16x16xbf16>, vector<8x16x16xbf16>, vector<8x16x16xf32> -> vector<8x16x16xf32>
    "tpu.trace_stop"() : () -> ()
    %65 = arith.truncf %64 : vector<8x16x16xf32> to vector<8x16x16xbf16>
    %66 = vector.extract_strided_slice %65 {offsets = [0, 0, 0], sizes = [4, 16, 16], strides = [1, 1, 1]} : vector<8x16x16xbf16> to vector<4x16x16xbf16>
    %67 = vector.shape_cast %66 : vector<4x16x16xbf16> to vector<64x16xbf16>
    %68 = vector.extract_strided_slice %65 {offsets = [4, 0, 0], sizes = [4, 16, 16], strides = [1, 1, 1]} : vector<8x16x16xbf16> to vector<4x16x16xbf16>
    %69 = vector.shape_cast %68 : vector<4x16x16xbf16> to vector<64x16xbf16>
    %70 = tpu.concatenate %67, %69 in 1 : vector<64x16xbf16>, vector<64x16xbf16> -> vector<64x32xbf16>
    %c0_21 = arith.constant 0 : index
    %c0_22 = arith.constant 0 : index
    %71 = vector.load %arg6[%c0_21, %c0_22] : memref<32x32xbf16, #tpu.memory_space<vmem>>, vector<32x32xbf16>
    %cst_23 = arith.constant dense<0.000000e+00> : vector<64x32xf32>
    %72 = tpu.matmul %70, %71, %cst_23 {dimension_numbers = #tpu.dot_dimension_numbers<[1], [0], [0], [1], [0, 0, 1, 1], [], []>} : vector<64x32xbf16>, vector<32x32xbf16>, vector<64x32xf32> -> vector<64x32xf32>
    %c0_24 = arith.constant 0 : index
    %c0_25 = arith.constant 0 : index
    %73 = vector.load %arg7[%c0_24, %c0_25] : memref<1x32xf32, #tpu.memory_space<vmem>>, vector<1x32xf32>
    %74 = vector.broadcast %73 : vector<1x32xf32> to vector<64x32xf32>
    %75 = arith.addf %72, %74 : vector<64x32xf32>
    %76 = arith.truncf %75 : vector<64x32xf32> to vector<64x32xbf16>
    %c0_26 = arith.constant 0 : index
    %c0_27 = arith.constant 0 : index
    %77 = vector.load %arg9[%c0_26, %c0_27] : memref<64x32xbf16, #tpu.memory_space<vmem>>, vector<64x32xbf16>
    tpu.vector_store %arg9[%c0_26, %c0_27], %76 {strides = array<i32>} : memref<64x32xbf16, #tpu.memory_space<vmem>>, vector<64x32xbf16>,
    return
  }
  func.func @transform_0(%arg0: i32) -> (i32, i32) {
    %c0_i32 = arith.constant 0 : i32
    %c0_i32_0 = arith.constant 0 : i32
    return %arg0, %c0_i32 : i32, i32
  }
  func.func @transform_1(%arg0: i32) -> (i32, i32) {
    %c0_i32 = arith.constant 0 : i32
    %c0_i32_0 = arith.constant 0 : i32
    %c0_i32_1 = arith.constant 0 : i32
    return %c0_i32, %c0_i32_0 : i32, i32
  }
  func.func @transform_2(%arg0: i32) -> (i32, i32) {
    %c0_i32 = arith.constant 0 : i32
    %c0_i32_0 = arith.constant 0 : i32
    %c0_i32_1 = arith.constant 0 : i32
    return %c0_i32, %c0_i32_0 : i32, i32
  }
  func.func @transform_3(%arg0: i32) -> (i32, i32) {
    %c0_i32 = arith.constant 0 : i32
    %c0_i32_0 = arith.constant 0 : i32
    %c0_i32_1 = arith.constant 0 : i32
    return %c0_i32, %c0_i32_0 : i32, i32
  }
  func.func @transform_4(%arg0: i32) -> (i32, i32) {
    %c0_i32 = arith.constant 0 : i32
    %c0_i32_0 = arith.constant 0 : i32
    %c0_i32_1 = arith.constant 0 : i32
    return %c0_i32, %c0_i32_0 : i32, i32
  }
  func.func @transform_5(%arg0: i32) -> (i32, i32) {
    %c0_i32 = arith.constant 0 : i32
    %c0_i32_0 = arith.constant 0 : i32
    %c0_i32_1 = arith.constant 0 : i32
    return %c0_i32, %c0_i32_0 : i32, i32
  }
  func.func @transform_6(%arg0: i32) -> (i32, i32) {
    %c0_i32 = arith.constant 0 : i32
    %c0_i32_0 = arith.constant 0 : i32
    %c0_i32_1 = arith.constant 0 : i32
    return %c0_i32, %c0_i32_0 : i32, i32
  }
  func.func @transform_7(%arg0: i32) -> (i32, i32, i32) {
    %c0_i32 = arith.constant 0 : i32
    %c0_i32_0 = arith.constant 0 : i32
    %c0_i32_1 = arith.constant 0 : i32
    %c0_i32_2 = arith.constant 0 : i32
    return %c0_i32, %c0_i32_0, %c0_i32_1 : i32, i32, i32
  }
  func.func @transform_8(%arg0: i32) -> (i32, i32) {
    %c0_i32 = arith.constant 0 : i32
    %c0_i32_0 = arith.constant 0 : i32
    return %arg0, %c0_i32 : i32, i32
  }
}

module attributes {stable_mosaic.version = 11 : i64} {
  func.func @_mlp_kernel(%arg0: i32, %arg1: memref<64x32xf32, #tpu.memory_space<vmem>>, %arg2: memref<64x32xbf16, #tpu.memory_space<vmem>>, %arg3: memref<1x32xf32, #tpu.memory_space<vmem>>, %arg4: memref<1x32xf32, #tpu.memory_space<vmem>>, %arg5: memref<32x128xbf16, #tpu.memory_space<vmem>>, %arg6: memref<1x128xf32, #tpu.memory_space<vmem>>, %arg7: memref<128x32xbf16, #tpu.memory_space<vmem>>, %arg8: memref<1x32xf32, #tpu.memory_space<vmem>>, %arg9: memref<64x32xf32, #tpu.memory_space<vmem>>) attributes {dimension_semantics = [#tpu.dimension_semantics<parallel>], iteration_bounds = array<i64: 2>, scalar_prefetch = 0 : i64, scratch_operands = 0 : i64, tpu.core_type = #tpu.core_type<tc>, window_params = [{transform_indices = @transform_0, window_bounds = array<i64: 64, 32>}, {transform_indices = @transform_1, window_bounds = array<i64: 64, 32>}, {pipeline_mode = #tpu.pipeline_mode<synchronous>, transform_indices = @transform_2, window_bounds = array<i64: 1, 32>}, {pipeline_mode = #tpu.pipeline_mode<synchronous>, transform_indices = @transform_3, window_bounds = array<i64: 1, 32>}, {pipeline_mode = #tpu.pipeline_mode<synchronous>, transform_indices = @transform_4, window_bounds = array<i64: 32, 128>}, {pipeline_mode = #tpu.pipeline_mode<synchronous>, transform_indices = @transform_5, window_bounds = array<i64: 1, 128>}, {pipeline_mode = #tpu.pipeline_mode<synchronous>, transform_indices = @transform_6, window_bounds = array<i64: 128, 32>}, {pipeline_mode = #tpu.pipeline_mode<synchronous>, transform_indices = @transform_7, window_bounds = array<i64: 1, 32>}, {transform_indices = @transform_8, window_bounds = array<i64: 64, 32>}]} {
    %c0 = arith.constant 0 : index
    %c0_0 = arith.constant 0 : index
    %0 = vector.load %arg1[%c0, %c0_0] : memref<64x32xf32, #tpu.memory_space<vmem>>, vector<64x32xf32>
    %c0_1 = arith.constant 0 : index
    %c0_2 = arith.constant 0 : index
    %1 = vector.load %arg2[%c0_1, %c0_2] : memref<64x32xbf16, #tpu.memory_space<vmem>>, vector<64x32xbf16>
    %2 = arith.extf %1 : vector<64x32xbf16> to vector<64x32xf32>
    %3 = arith.addf %0, %2 : vector<64x32xf32>
    %cst = arith.constant dense<0.000000e+00> : vector<64xf32>
    %4 = vector.multi_reduction <add>, %3, %cst [1] : vector<64x32xf32> to vector<64xf32>
    %5 = vector.shape_cast %4 : vector<64xf32> to vector<64x1xf32>
    %cst_3 = arith.constant 3.200000e+01 : f32
    %6 = vector.broadcast %cst_3 : f32 to vector<64x1xf32>
    %7 = arith.divf %5, %6 : vector<64x1xf32>
    %8 = vector.broadcast %7 : vector<64x1xf32> to vector<64x32xf32>
    %9 = arith.subf %3, %8 : vector<64x32xf32>
    %10 = arith.mulf %9, %9 : vector<64x32xf32>
    %cst_4 = arith.constant dense<0.000000e+00> : vector<64xf32>
    %11 = vector.multi_reduction <add>, %10, %cst_4 [1] : vector<64x32xf32> to vector<64xf32>
    %12 = vector.shape_cast %11 : vector<64xf32> to vector<64x1xf32>
    %cst_5 = arith.constant 3.200000e+01 : f32
    %13 = vector.broadcast %cst_5 : f32 to vector<64x1xf32>
    %14 = arith.divf %12, %13 : vector<64x1xf32>
    %cst_6 = arith.constant 9.99999974E-6 : f32
    %15 = vector.broadcast %cst_6 : f32 to vector<64x1xf32>
    %16 = arith.addf %14, %15 : vector<64x1xf32>
    %17 = math.rsqrt %16 : vector<64x1xf32>
    %18 = vector.broadcast %17 : vector<64x1xf32> to vector<64x32xf32>
    %19 = arith.mulf %9, %18 : vector<64x32xf32>
    %c0_7 = arith.constant 0 : index
    %c0_8 = arith.constant 0 : index
    %20 = vector.load %arg3[%c0_7, %c0_8] : memref<1x32xf32, #tpu.memory_space<vmem>>, vector<1x32xf32>
    %21 = vector.broadcast %20 : vector<1x32xf32> to vector<64x32xf32>
    %22 = arith.mulf %19, %21 : vector<64x32xf32>
    %c0_9 = arith.constant 0 : index
    %c0_10 = arith.constant 0 : index
    %23 = vector.load %arg4[%c0_9, %c0_10] : memref<1x32xf32, #tpu.memory_space<vmem>>, vector<1x32xf32>
    %24 = vector.broadcast %23 : vector<1x32xf32> to vector<64x32xf32>
    %25 = arith.addf %22, %24 : vector<64x32xf32>
    %26 = arith.truncf %25 : vector<64x32xf32> to vector<64x32xbf16>
    %c0_11 = arith.constant 0 : index
    %c0_12 = arith.constant 0 : index
    %27 = vector.load %arg5[%c0_11, %c0_12] : memref<32x128xbf16, #tpu.memory_space<vmem>>, vector<32x128xbf16>
    %cst_13 = arith.constant dense<0.000000e+00> : vector<64x128xf32>
    %28 = tpu.matmul %26, %27, %cst_13 {dimension_numbers = #tpu.dot_dimension_numbers<[1], [0], [0], [1], [0, 0, 1, 1], [], []>} : vector<64x32xbf16>, vector<32x128xbf16>, vector<64x128xf32> -> vector<64x128xf32>
    %c0_14 = arith.constant 0 : index
    %c0_15 = arith.constant 0 : index
    %29 = vector.load %arg6[%c0_14, %c0_15] : memref<1x128xf32, #tpu.memory_space<vmem>>, vector<1x128xf32>
    %30 = vector.broadcast %29 : vector<1x128xf32> to vector<64x128xf32>
    %31 = arith.addf %28, %30 : vector<64x128xf32>
    %cst_16 = arith.constant 5.000000e-01 : f32
    %32 = vector.broadcast %cst_16 : f32 to vector<64x128xf32>
    %33 = arith.mulf %32, %31 : vector<64x128xf32>
    %cst_17 = arith.constant 0.707106769 : f32
    %34 = vector.broadcast %cst_17 : f32 to vector<64x128xf32>
    %35 = arith.mulf %31, %34 : vector<64x128xf32>
    %36 = math.erf %35 : vector<64x128xf32>
    %cst_18 = arith.constant 1.000000e+00 : f32
    %37 = vector.broadcast %cst_18 : f32 to vector<64x128xf32>
    %38 = arith.addf %37, %36 : vector<64x128xf32>
    %39 = arith.mulf %33, %38 : vector<64x128xf32>
    %40 = arith.truncf %39 : vector<64x128xf32> to vector<64x128xbf16>
    %c0_19 = arith.constant 0 : index
    %c0_20 = arith.constant 0 : index
    %41 = vector.load %arg7[%c0_19, %c0_20] : memref<128x32xbf16, #tpu.memory_space<vmem>>, vector<128x32xbf16>
    %cst_21 = arith.constant dense<0.000000e+00> : vector<64x32xf32>
    %42 = tpu.matmul %40, %41, %cst_21 {dimension_numbers = #tpu.dot_dimension_numbers<[1], [0], [0], [1], [0, 0, 1, 1], [], []>} : vector<64x128xbf16>, vector<128x32xbf16>, vector<64x32xf32> -> vector<64x32xf32>
    %c0_22 = arith.constant 0 : index
    %c0_23 = arith.constant 0 : index
    %43 = vector.load %arg8[%c0_22, %c0_23] : memref<1x32xf32, #tpu.memory_space<vmem>>, vector<1x32xf32>
    %44 = vector.broadcast %43 : vector<1x32xf32> to vector<64x32xf32>
    %45 = arith.addf %42, %44 : vector<64x32xf32>
    %46 = arith.addf %3, %45 : vector<64x32xf32>
    %c0_24 = arith.constant 0 : index
    %c0_25 = arith.constant 0 : index
    %47 = vector.load %arg9[%c0_24, %c0_25] : memref<64x32xf32, #tpu.memory_space<vmem>>, vector<64x32xf32>
    tpu.vector_store %arg9[%c0_24, %c0_25], %46 {strides = array<i32>} : memref<64x32xf32, #tpu.memory_space<vmem>>, vector<64x32xf32>,
    return
  }
  func.func @transform_0(%arg0: i32) -> (i32, i32) {
    %c0_i32 = arith.constant 0 : i32
    %c0_i32_0 = arith.constant 0 : i32
    return %arg0, %c0_i32 : i32, i32
  }
  func.func @transform_1(%arg0: i32) -> (i32, i32) {
    %c0_i32 = arith.constant 0 : i32
    %c0_i32_0 = arith.constant 0 : i32
    return %arg0, %c0_i32 : i32, i32
  }
  func.func @transform_2(%arg0: i32) -> (i32, i32) {
    %c0_i32 = arith.constant 0 : i32
    %c0_i32_0 = arith.constant 0 : i32
    %c0_i32_1 = arith.constant 0 : i32
    return %c0_i32, %c0_i32_0 : i32, i32
  }
  func.func @transform_3(%arg0: i32) -> (i32, i32) {
    %c0_i32 = arith.constant 0 : i32
    %c0_i32_0 = arith.constant 0 : i32
    %c0_i32_1 = arith.constant 0 : i32
    return %c0_i32, %c0_i32_0 : i32, i32
  }
  func.func @transform_4(%arg0: i32) -> (i32, i32) {
    %c0_i32 = arith.constant 0 : i32
    %c0_i32_0 = arith.constant 0 : i32
    %c0_i32_1 = arith.constant 0 : i32
    return %c0_i32, %c0_i32_0 : i32, i32
  }
  func.func @transform_5(%arg0: i32) -> (i32, i32) {
    %c0_i32 = arith.constant 0 : i32
    %c0_i32_0 = arith.constant 0 : i32
    %c0_i32_1 = arith.constant 0 : i32
    return %c0_i32, %c0_i32_0 : i32, i32
  }
  func.func @transform_6(%arg0: i32) -> (i32, i32) {
    %c0_i32 = arith.constant 0 : i32
    %c0_i32_0 = arith.constant 0 : i32
    %c0_i32_1 = arith.constant 0 : i32
    return %c0_i32, %c0_i32_0 : i32, i32
  }
  func.func @transform_7(%arg0: i32) -> (i32, i32) {
    %c0_i32 = arith.constant 0 : i32
    %c0_i32_0 = arith.constant 0 : i32
    %c0_i32_1 = arith.constant 0 : i32
    return %c0_i32, %c0_i32_0 : i32, i32
  }
  func.func @transform_8(%arg0: i32) -> (i32, i32) {
    %c0_i32 = arith.constant 0 : i32
    %c0_i32_0 = arith.constant 0 : i32
    return %arg0, %c0_i32 : i32, i32
  }
}

</mosaic_0001>

<llo_original>
// kernel: stage_forward.5
$region0: #{stage_forward.5}
  #allocation0 [shape = 'u32[]', space=smem, size = 0x4, offset = 0x4, fixed_abs, tag = 'smem constant byte address 0x4 - core index']
  #allocation1 [shape = 'u32[144,128]{1,0:T(1,128)}', space=vmem, size = 0x12000, scoped, tag = 'internal scratch']
  %s0 = inlined_call_operand.vmem [shape: f32[128,32], index: 0, kind: input, shape index: {}]
  %s1 = inlined_call_operand.vmem [shape: bf16[128,32], index: 1, kind: input, shape index: {}]
  %s2 = inlined_call_operand.vmem [shape: f32[1,32], index: 2, kind: input, shape index: {}]
  %s3 = inlined_call_operand.vmem [shape: f32[1,32], index: 3, kind: input, shape index: {}]
  %s4 = inlined_call_operand.vmem [shape: bf16[32,128], index: 4, kind: input, shape index: {}]
  %s5 = inlined_call_operand.vmem [shape: f32[1,128], index: 5, kind: input, shape index: {}]
  %s6 = inlined_call_operand.vmem [shape: bf16[128,32], index: 6, kind: input, shape index: {}]
  %s7 = inlined_call_operand.vmem [shape: f32[1,32], index: 7, kind: input, shape index: {}]
  %s8 = inlined_call_operand.vmem [shape: f32[128,32], index: 8, kind: output, shape index: {}]
  %s9 = sld [smem:[#allocation0]]
  $region65: #{stage_forward.5} parent=0
    _
  %s11 = ssub.s32 1, %s9
  %s12 = scalar_select 0, %s11, %s9
  loop: start=0, step=1, limit=4
  $region2: #{stage_forward.5} parent=0 // loop_pre_header
    _
  $region3: #{stage_forward.5} parent=0 // loop_header
    %s14 = sphi 0, %s18
    %p15 = scmp.ge.s32.totalorder %s14, 4
    %s24 = sphi 0, %s26
    %s27 = sphi 0, %s24
    %s28 = sphi 0, %s27
    %s44 = sphi 0, %s28
    %s50 = sphi 0, %s52
    %s53 = sphi 0, %s50
    %s54 = sphi 0, %s53
    %s70 = sphi 0, %s54
    %s74 = sphi 0, %s74
    %s76 = sphi 0, %s74
    %s77 = sphi 0, %s76
    %s91 = sphi 0, %s77
    %s95 = sphi 0, %s95
    %s97 = sphi 0, %s95
    %s98 = sphi 0, %s97
    %s112 = sphi 0, %s98
    %s116 = sphi 0, %s116
    %s118 = sphi 0, %s116
    %s119 = sphi 0, %s118
    %s133 = sphi 0, %s119
    %s137 = sphi 0, %s137
    %s139 = sphi 0, %s137
    %s140 = sphi 0, %s139
    %s154 = sphi 0, %s140
    %s158 = sphi 0, %s158
    %s160 = sphi 0, %s158
    %s161 = sphi 0, %s160
    %s175 = sphi 0, %s161
    %s179 = sphi 0, %s179
    %s181 = sphi 0, %s179
    %s182 = sphi 0, %s181
    %s196 = sphi 0, %s182
    %s202 = sphi 0, %s204
    %s205 = sphi 0, %s202
    %s206 = sphi 0, %s205
    %s222 = sphi 0, %s206
  $region4: #{stage_forward.5} parent=0 // loop_header_branch
    %17 = sbr.rel (%p15) target = $region8
  $region5: #{stage_forward.5} parent=0 // loop_body
    %s19 = ssub.s32 %s14, 1
    %s20 = ssub.s32 %s14, 2
    %s21 = sadd.s32 %s14, 1
    %s22 = ssub.s32 %s14, %s21
    %p23 = scmp.eq.s32.totalorder %s22, 0
    %s25 = sadd.s32 %s24, 1
    %s26 = scalar_select %p23, %s24, %s25
    %p29 = pneg %p23
    %p30 = scmp.eq.s32.totalorder %s14, 1
    %p31 = por %p29, %p30
    %p32 = scmp.ne.s32.totalorder %s24, %s27
    %p33 = scmp.eq.s32.totalorder %s14, 0
    %p34 = por %p32, %p33
    %p35 = scmp.ne.s32.totalorder %s24, %s27
    %p36 = scmp.eq.s32.totalorder %s19, 1
    %p37 = por %p35, %p36
    %p38 = scmp.ne.s32.totalorder %s27, %s28
    %p39 = scmp.eq.s32.totalorder %s19, 0
    %p40 = por %p38, %p39
    %p41 = scmp.ne.s32.totalorder %s27, %s28
    %p42 = scmp.eq.s32.totalorder %s20, 1
    %p43 = por %p41, %p42
    %p45 = scmp.ne.s32.totalorder %s28, %s44
    %p46 = scmp.eq.s32.totalorder %s20, 0
    %p47 = por %p45, %p46
    %s48 = ssub.s32 %s14, %s21
    %p49 = scmp.eq.s32.totalorder %s48, 0
    %s51 = sadd.s32 %s50, 1
    %s52 = scalar_select %p49, %s50, %s51
    %p55 = pneg %p49
    %p56 = scmp.eq.s32.totalorder %s14, 1
    %p57 = por %p55, %p56
    %p58 = scmp.ne.s32.totalorder %s50, %s53
    %p59 = scmp.eq.s32.totalorder %s14, 0
    %p60 = por %p58, %p59
    %p61 = scmp.ne.s32.totalorder %s50, %s53
    %p62 = scmp.eq.s32.totalorder %s19, 1
    %p63 = por %p61, %p62
    %p64 = scmp.ne.s32.totalorder %s53, %s54
    %p65 = scmp.eq.s32.totalorder %s19, 0
    %p66 = por %p64, %p65
    %p67 = scmp.ne.s32.totalorder %s53, %s54
    %p68 = scmp.eq.s32.totalorder %s20, 1
    %p69 = por %p67, %p68
    %p71 = scmp.ne.s32.totalorder %s54, %s70
    %p72 = scmp.eq.s32.totalorder %s20, 0
    %p73 = por %p71, %p72
    %s75 = sadd.s32 %s74, 1
    %p78 = scmp.eq.s32.totalorder %s14, 1
    %p79 = scmp.ne.s32.totalorder %s74, %s76
    %p80 = scmp.eq.s32.totalorder %s14, 0
    %p81 = por %p79, %p80
    %p82 = scmp.ne.s32.totalorder %s74, %s76
    %p83 = scmp.eq.s32.totalorder %s19, 1
    %p84 = por %p82, %p83
    %p85 = scmp.ne.s32.totalorder %s76, %s77
    %p86 = scmp.eq.s32.totalorder %s19, 0
    %p87 = por %p85, %p86
    %p88 = scmp.ne.s32.totalorder %s76, %s77
    %p89 = scmp.eq.s32.totalorder %s20, 1
    %p90 = por %p88, %p89
    %p92 = scmp.ne.s32.totalorder %s77, %s91
    %p93 = scmp.eq.s32.totalorder %s20, 0
    %p94 = por %p92, %p93
    %s96 = sadd.s32 %s95, 1
    %p99 = scmp.eq.s32.totalorder %s14, 1
    %p100 = scmp.ne.s32.totalorder %s95, %s97
    %p101 = scmp.eq.s32.totalorder %s14, 0
    %p102 = por %p100, %p101
    %p103 = scmp.ne.s32.totalorder %s95, %s97
    %p104 = scmp.eq.s32.totalorder %s19, 1
    %p105 = por %p103, %p104
    %p106 = scmp.ne.s32.totalorder %s97, %s98
    %p107 = scmp.eq.s32.totalorder %s19, 0
    %p108 = por %p106, %p107
    %p109 = scmp.ne.s32.totalorder %s97, %s98
    %p110 = scmp.eq.s32.totalorder %s20, 1
    %p111 = por %p109, %p110
    %p113 = scmp.ne.s32.totalorder %s98, %s112
    %p114 = scmp.eq.s32.totalorder %s20, 0
    %p115 = por %p113, %p114
    %s117 = sadd.s32 %s116, 1
    %p120 = scmp.eq.s32.totalorder %s14, 1
    %p121 = scmp.ne.s32.totalorder %s116, %s118
    %p122 = scmp.eq.s32.totalorder %s14, 0
    %p123 = por %p121, %p122
    %p124 = scmp.ne.s32.totalorder %s116, %s118
    %p125 = scmp.eq.s32.totalorder %s19, 1
    %p126 = por %p124, %p125
    %p127 = scmp.ne.s32.totalorder %s118, %s119
    %p128 = scmp.eq.s32.totalorder %s19, 0
    %p129 = por %p127, %p128
    %p130 = scmp.ne.s32.totalorder %s118, %s119
    %p131 = scmp.eq.s32.totalorder %s20, 1
    %p132 = por %p130, %p131
    %p134 = scmp.ne.s32.totalorder %s119, %s133
    %p135 = scmp.eq.s32.totalorder %s20, 0
    %p136 = por %p134, %p135
    %s138 = sadd.s32 %s137, 1
    %p141 = scmp.eq.s32.totalorder %s14, 1
    %p142 = scmp.ne.s32.totalorder %s137, %s139
    %p143 = scmp.eq.s32.totalorder %s14, 0
    %p144 = por %p142, %p143
    %p145 = scmp.ne.s32.totalorder %s137, %s139
    %p146 = scmp.eq.s32.totalorder %s19, 1
    %p147 = por %p145, %p146
    %p148 = scmp.ne.s32.totalorder %s139, %s140
    %p149 = scmp.eq.s32.totalorder %s19, 0
    %p150 = por %p148, %p149
    %p151 = scmp.ne.s32.totalorder %s139, %s140
    %p152 = scmp.eq.s32.totalorder %s20, 1
    %p153 = por %p151, %p152
    %p155 = scmp.ne.s32.totalorder %s140, %s154
    %p156 = scmp.eq.s32.totalorder %s20, 0
    %p157 = por %p155, %p156
    %s159 = sadd.s32 %s158, 1
    %p162 = scmp.eq.s32.totalorder %s14, 1
    %p163 = scmp.ne.s32.totalorder %s158, %s160
    %p164 = scmp.eq.s32.totalorder %s14, 0
    %p165 = por %p163, %p164
    %p166 = scmp.ne.s32.totalorder %s158, %s160
    %p167 = scmp.eq.s32.totalorder %s19, 1
    %p168 = por %p166, %p167
    %p169 = scmp.ne.s32.totalorder %s160, %s161
    %p170 = scmp.eq.s32.totalorder %s19, 0
    %p171 = por %p169, %p170
    %p172 = scmp.ne.s32.totalorder %s160, %s161
    %p173 = scmp.eq.s32.totalorder %s20, 1
    %p174 = por %p172, %p173
    %p176 = scmp.ne.s32.totalorder %s161, %s175
    %p177 = scmp.eq.s32.totalorder %s20, 0
    %p178 = por %p176, %p177
    %s180 = sadd.s32 %s179, 1
    %p183 = scmp.eq.s32.totalorder %s14, 1
    %p184 = scmp.ne.s32.totalorder %s179, %s181
    %p185 = scmp.eq.s32.totalorder %s14, 0
    %p186 = por %p184, %p185
    %p187 = scmp.ne.s32.totalorder %s179, %s181
    %p188 = scmp.eq.s32.totalorder %s19, 1
    %p189 = por %p187, %p188
    %p190 = scmp.ne.s32.totalorder %s181, %s182
    %p191 = scmp.eq.s32.totalorder %s19, 0
    %p192 = por %p190, %p191
    %p193 = scmp.ne.s32.totalorder %s181, %s182
    %p194 = scmp.eq.s32.totalorder %s20, 1
    %p195 = por %p193, %p194
    %p197 = scmp.ne.s32.totalorder %s182, %s196
    %p198 = scmp.eq.s32.totalorder %s20, 0
    %p199 = por %p197, %p198
    %s200 = ssub.s32 %s14, %s21
    %p201 = scmp.eq.s32.totalorder %s200, 0
    %s203 = sadd.s32 %s202, 1
    %s204 = scalar_select %p201, %s202, %s203
    %p207 = pneg %p201
    %p208 = scmp.eq.s32.totalorder %s14, 1
    %p209 = por %p207, %p208
    %p210 = scmp.ne.s32.totalorder %s202, %s205
    %p211 = scmp.eq.s32.totalorder %s14, 0
    %p212 = por %p210, %p211
    %p213 = scmp.ne.s32.totalorder %s202, %s205
    %p214 = scmp.eq.s32.totalorder %s19, 1
    %p215 = por %p213, %p214
    %p216 = scmp.ne.s32.totalorder %s205, %s206
    %p217 = scmp.eq.s32.totalorder %s19, 0
    %p218 = por %p216, %p217
    %p219 = scmp.ne.s32.totalorder %s205, %s206
    %p220 = scmp.eq.s32.totalorder %s20, 1
    %p221 = por %p219, %p220
    %p223 = scmp.ne.s32.totalorder %s206, %s222
    %p224 = scmp.eq.s32.totalorder %s20, 0
    %p225 = por %p223, %p224
    %p226 = scmp.le.s32.totalorder 1, %s14
    %p227 = scmp.lt.s32.totalorder %s14, 3
    %p228 = pnand %p226, %p227
    %p229 = pneg %p228
    // Predicated region
    $region9: #{stage_forward.5} parent=5 // pred_check
      _
    $region10: #{stage_forward.5} parent=5 // pred_check_branch
      %231 = sbr.rel (%p228) target = $region12
    $region11: #{stage_forward.5} parent=5 // pred_region
      %s232 = ssub.s32 %s14, 1
      // Predicated region
      $region13: #{stage_forward.5} parent=11 // pred_check
        %p233 = pneg %p87
      $region14: #{stage_forward.5} parent=11 // pred_check_branch
        %235 = sbr.rel (%p233) target = $region16
      $region15: #{stage_forward.5} parent=11 // pred_region
        _
      $region16: #{stage_forward.5} parent=11 // pred_fallthru
        _
      // Predicated region
      $region17: #{stage_forward.5} parent=11 // pred_check
        %p236 = pneg %p108
      $region18: #{stage_forward.5} parent=11 // pred_check_branch
        %238 = sbr.rel (%p236) target = $region20
      $region19: #{stage_forward.5} parent=11 // pred_region
        _
      $region20: #{stage_forward.5} parent=11 // pred_fallthru
        _
      // Predicated region
      $region21: #{stage_forward.5} parent=11 // pred_check
        %p239 = pneg %p129
      $region22: #{stage_forward.5} parent=11 // pred_check_branch
        %241 = sbr.rel (%p239) target = $region24
      $region23: #{stage_forward.5} parent=11 // pred_region
        _
      $region24: #{stage_forward.5} parent=11 // pred_fallthru
        _
      // Predicated region
      $region25: #{stage_forward.5} parent=11 // pred_check
        %p242 = pneg %p150
      $region26: #{stage_forward.5} parent=11 // pred_check_branch
        %244 = sbr.rel (%p242) target = $region28
      $region27: #{stage_forward.5} parent=11 // pred_region
        _
      $region28: #{stage_forward.5} parent=11 // pred_fallthru
        _
      // Predicated region
      $region29: #{stage_forward.5} parent=11 // pred_check
        %p245 = pneg %p171
      $region30: #{stage_forward.5} parent=11 // pred_check_branch
        %247 = sbr.rel (%p245) target = $region32
      $region31: #{stage_forward.5} parent=11 // pred_region
        _
      $region32: #{stage_forward.5} parent=11 // pred_fallthru
        _
      // Predicated region
      $region33: #{stage_forward.5} parent=11 // pred_check
        %p248 = pneg %p192
      $region34: #{stage_forward.5} parent=11 // pred_check_branch
        %250 = sbr.rel (%p248) target = $region36
      $region35: #{stage_forward.5} parent=11 // pred_region
        _
      $region36: #{stage_forward.5} parent=11 // pred_fallthru
        _
    $region12: #{stage_forward.5} parent=5 // pred_fallthru
      _
    %p251 = scmp.lt.s32.totalorder %s14, 2
    // Predicated region
    $region37: #{stage_forward.5} parent=5 // pred_check
      %p252 = pneg %p251
    $region38: #{stage_forward.5} parent=5 // pred_check_branch
      %254 = sbr.rel (%p252) target = $region40
    $region39: #{stage_forward.5} parent=5 // pred_region
      // Predicated region
      $region41: #{stage_forward.5} parent=39 // pred_check
        %p255 = pneg %p34
      $region42: #{stage_forward.5} parent=39 // pred_check_branch
        %257 = sbr.rel (%p255) target = $region44
      $region43: #{stage_forward.5} parent=39 // pred_region
        %s258 = smul.u32 8, %s14
        %p259 = scmp.lt.s32.totalorder %s258, 15
        %s260 = scalar_select %p259, %s258, 15
        %s261 = smul.addr %s260, 8
        %s262 = scalar_lea.vmem %s0, %s261
        %s263 = smul.u32 8, %s14
      $region44: #{stage_forward.5} parent=39 // pred_fallthru
        _
      // Predicated region
      $region45: #{stage_forward.5} parent=39 // pred_check
        %p264 = pneg %p60
      $region46: #{stage_forward.5} parent=39 // pred_check_branch
        %266 = sbr.rel (%p264) target = $region48
      $region47: #{stage_forward.5} parent=39 // pred_region
        %s267 = smul.u32 8, %s14
        %p268 = scmp.lt.s32.totalorder %s267, 15
        %s269 = scalar_select %p268, %s267, 15
        %s270 = smul.addr %s269, 4
        %s271 = scalar_lea.vmem %s1, %s270
        %s272 = smul.u32 8, %s14
      $region48: #{stage_forward.5} parent=39 // pred_fallthru
        _
    $region40: #{stage_forward.5} parent=5 // pred_fallthru
      _
    %p273 = scmp.le.s32.totalorder 1, %s14
    %p274 = scmp.lt.s32.totalorder %s14, 3
    %p275 = pnand %p273, %p274
    %p276 = pneg %p275
    // Predicated region
    $region49: #{stage_forward.5} parent=5 // pred_check
      _
    $region50: #{stage_forward.5} parent=5 // pred_check_branch
      %278 = sbr.rel (%p275) target = $region52
    $region51: #{stage_forward.5} parent=5 // pred_region
      %s279 = ssub.s32 %s14, 1
      %s280 = smul.u32 8, %s19
      %p281 = scmp.lt.s32.totalorder %s280, 15
      %s282 = scalar_select %p281, %s280, 15
      %s283 = smul.addr %s282, 8
      %s284 = scalar_lea.vmem %s0, %s283
      %p285 = pneg %p40
      %p286 = pneg %p37
      %s287 = smul.u32 8, %s19
      %p288 = scmp.lt.s32.totalorder %s287, 15
      %s289 = scalar_select %p288, %s287, 15
      %s290 = smul.addr %s289, 4
      %s291 = scalar_lea.vmem %s1, %s290
      %p292 = pneg %p66
      %p293 = pneg %p63
      %p294 = pneg %p87
      %p295 = pneg %p84
      %p296 = pneg %p108
      %p297 = pneg %p105
      %p298 = pneg %p129
      %p299 = pneg %p126
      %p300 = pneg %p150
      %p301 = pneg %p147
      %p302 = pneg %p171
      %p303 = pneg %p168
      %p304 = pneg %p192
      %p305 = pneg %p189
      %p306 = pneg %p218
      %p307 = pneg %p215
      %s308 = smul.u32 8, %s19
      %p309 = scmp.lt.s32.totalorder %s308, 15
      %s310 = scalar_select %p309, %s308, 15
      %s311 = smul.addr %s310, 8
      %s312 = scalar_lea.vmem %s8, %s311
      %s313 = smul.u32 8, %s19
      %p314 = scmp.lt.s32.totalorder %s313, 15
      %s315 = scalar_select %p314, %s313, 15
      %s316 = smul.addr %s315, 8
      %s317 = scalar_lea.vmem %s0, %s316
      %s318 = smul.u32 8, %s19
      %s319 = smul.u32 8, %s19
      %p320 = scmp.lt.s32.totalorder %s319, 15
      %s321 = scalar_select %p320, %s319, 15
      %s322 = smul.addr %s321, 4
      %s323 = scalar_lea.vmem %s1, %s322
      %s324 = smul.u32 8, %s19
      %s325 = smul.u32 8, %s19
      %p326 = scmp.lt.s32.totalorder %s325, 15
      %s327 = scalar_select %p326, %s325, 15
      %s328 = smul.addr %s327, 8
      %s329 = scalar_lea.vmem %s8, %s328
      %s330 = smul.u32 8, %s19
      %v332 = vld [vmem:[%s317] sm:$0xff]
      %v333 = vld [vmem:[%s317 + $0x8] sm:$0xff]
      %v334 = vld [vmem:[%s317 + $0x10] sm:$0xff]
      %v335 = vld [vmem:[%s317 + $0x18] sm:$0xff]
      %v336 = vld [vmem:[%s317 + $0x20] sm:$0xff]
      %v337 = vld [vmem:[%s317 + $0x28] sm:$0xff]
      %v338 = vld [vmem:[%s317 + $0x30] sm:$0xff]
      %v339 = vld [vmem:[%s317 + $0x38] sm:$0xff]
      %v340 = vld [vmem:[%s323] sm:$0xf]
      %v341 = vld [vmem:[%s323 + $0x4] sm:$0xf]
      %v342 = vld [vmem:[%s323 + $0x8] sm:$0xf]
      %v343 = vld [vmem:[%s323 + $0xc] sm:$0xf]
      %v344 = vld [vmem:[%s323 + $0x10] sm:$0xf]
      %v345 = vld [vmem:[%s323 + $0x14] sm:$0xf]
      %v346 = vld [vmem:[%s323 + $0x18] sm:$0xf]
      %v347 = vld [vmem:[%s323 + $0x1c] sm:$0xf]
      %v348 = vunpack.c.l.bf16 %v340
      %v349 = vunpack.c.l.bf16 %v341
      %v350 = vunpack.c.l.bf16 %v342
      %v351 = vunpack.c.l.bf16 %v343
      %v352 = vunpack.c.l.bf16 %v344
      %v353 = vunpack.c.l.bf16 %v345
      %v354 = vunpack.c.l.bf16 %v346
      %v355 = vunpack.c.l.bf16 %v347
      %v356 = vadd.f32 %v332, %v348
      %v357 = vadd.f32 %v333, %v349
      %v358 = vadd.f32 %v334, %v350
      %v359 = vadd.f32 %v335, %v351
      %v360 = vadd.f32 %v336, %v352
      %v361 = vadd.f32 %v337, %v353
      %v362 = vadd.f32 %v338, %v354
      %v363 = vadd.f32 %v339, %v355
      %vm364 = vcmask 261120
      %v365 = vsel %vm364, %v356, 0.0
      %366 = vadd.xlane.f32.xlu0 %v365
      %v367 = vpop.xlane.xlu0 %366
      %v368 = vsel %vm364, %v357, 0.0
      %369 = vadd.xlane.f32.xlu0 %v368
      %v370 = vpop.xlane.xlu0 %369
      %v371 = vsel %vm364, %v358, 0.0
      %372 = vadd.xlane.f32.xlu0 %v371
      %v373 = vpop.xlane.xlu0 %372
      %v374 = vsel %vm364, %v359, 0.0
      %375 = vadd.xlane.f32.xlu0 %v374
      %v376 = vpop.xlane.xlu0 %375
      %v377 = vsel %vm364, %v360, 0.0
      %378 = vadd.xlane.f32.xlu0 %v377
      %v379 = vpop.xlane.xlu0 %378
      %v380 = vsel %vm364, %v361, 0.0
      %381 = vadd.xlane.f32.xlu0 %v380
      %v382 = vpop.xlane.xlu0 %381
      %v383 = vsel %vm364, %v362, 0.0
      %384 = vadd.xlane.f32.xlu0 %v383
      %v385 = vpop.xlane.xlu0 %384
      %v386 = vsel %vm364, %v363, 0.0
      %387 = vadd.xlane.f32.xlu0 %v386
      %v388 = vpop.xlane.xlu0 %387
      %v389 = vrcp.pop 32.0
      %v390 = vmul.f32 %v367, %v389
      %v391 = vmul.f32 %v370, %v389
      %v392 = vmul.f32 %v373, %v389
      %v393 = vmul.f32 %v376, %v389
      %v394 = vmul.f32 %v379, %v389
      %v395 = vmul.f32 %v382, %v389
      %v396 = vmul.f32 %v385, %v389
      %v397 = vmul.f32 %v388, %v389
      %v398 = vsub.f32 %v356, %v390
      %v399 = vsub.f32 %v357, %v391
      %v400 = vsub.f32 %v358, %v392
      %v401 = vsub.f32 %v359, %v393
      %v402 = vsub.f32 %v360, %v394
      %v403 = vsub.f32 %v361, %v395
      %v404 = vsub.f32 %v362, %v396
      %v405 = vsub.f32 %v363, %v397
      %v406 = vmul.f32 %v398, %v398
      %v407 = vmul.f32 %v399, %v399
      %v408 = vmul.f32 %v400, %v400
      %v409 = vmul.f32 %v401, %v401
      %v410 = vmul.f32 %v402, %v402
      %v411 = vmul.f32 %v403, %v403
      %v412 = vmul.f32 %v404, %v404
      %v413 = vmul.f32 %v405, %v405
      %v414 = vsel %vm364, %v406, 0.0
      %415 = vadd.xlane.f32.xlu0 %v414
      %v416 = vpop.xlane.xlu0 %415
      %v417 = vsel %vm364, %v407, 0.0
      %418 = vadd.xlane.f32.xlu0 %v417
      %v419 = vpop.xlane.xlu0 %418
      %v420 = vsel %vm364, %v408, 0.0
      %421 = vadd.xlane.f32.xlu0 %v420
      %v422 = vpop.xlane.xlu0 %421
      %v423 = vsel %vm364, %v409, 0.0
      %424 = vadd.xlane.f32.xlu0 %v423
      %v425 = vpop.xlane.xlu0 %424
      %v426 = vsel %vm364, %v410, 0.0
      %427 = vadd.xlane.f32.xlu0 %v426
      %v428 = vpop.xlane.xlu0 %427
      %v429 = vsel %vm364, %v411, 0.0
      %430 = vadd.xlane.f32.xlu0 %v429
      %v431 = vpop.xlane.xlu0 %430
      %v432 = vsel %vm364, %v412, 0.0
      %433 = vadd.xlane.f32.xlu0 %v432
      %v434 = vpop.xlane.xlu0 %433
      %v435 = vsel %vm364, %v413, 0.0
      %436 = vadd.xlane.f32.xlu0 %v435
      %v437 = vpop.xlane.xlu0 %436
      %v438 = vmul.f32 %v416, %v389
      %v439 = vmul.f32 %v419, %v389
      %v440 = vmul.f32 %v422, %v389
      %v441 = vmul.f32 %v425, %v389
      %v442 = vmul.f32 %v428, %v389
      %v443 = vmul.f32 %v431, %v389
      %v444 = vmul.f32 %v434, %v389
      %v445 = vmul.f32 %v437, %v389
      %v446 = vadd.f32 %v438, 1e-05
      %v447 = vadd.f32 %v439, 1e-05
      %v448 = vadd.f32 %v440, 1e-05
      %v449 = vadd.f32 %v441, 1e-05
      %v450 = vadd.f32 %v442, 1e-05
      %v451 = vadd.f32 %v443, 1e-05
      %v452 = vadd.f32 %v444, 1e-05
      %v453 = vadd.f32 %v445, 1e-05
      %v454 = vrsqrt.pop %v446
      %v455 = vrsqrt.pop %v447
      %v456 = vrsqrt.pop %v448
      %v457 = vrsqrt.pop %v449
      %v458 = vrsqrt.pop %v450
      %v459 = vrsqrt.pop %v451
      %v460 = vrsqrt.pop %v452
      %v461 = vrsqrt.pop %v453
      %v462 = vmul.f32 %v398, %v454
      %v463 = vmul.f32 %v399, %v455
      %v464 = vmul.f32 %v400, %v456
      %v465 = vmul.f32 %v401, %v457
      %v466 = vmul.f32 %v402, %v458
      %v467 = vmul.f32 %v403, %v459
      %v468 = vmul.f32 %v404, %v460
      %v469 = vmul.f32 %v405, %v461
      %v470 = vld [vmem:[%s2] sm:$0x1]
      %v472 = vlaneseq
      %v473 = vshrl.u32 %v472, 7
      %v474 = vsub.s32 0, %v473
      %v475 = vrot.slane %v470, %v474
      %v477 = vmul.f32 %v462, %v475
      %v478 = vmul.f32 %v463, %v475
      %v479 = vmul.f32 %v464, %v475
      %v480 = vmul.f32 %v465, %v475
      %v481 = vmul.f32 %v466, %v475
      %v482 = vmul.f32 %v467, %v475
      %v483 = vmul.f32 %v468, %v475
      %v484 = vmul.f32 %v469, %v475
      %v485 = vld [vmem:[%s3] sm:$0x1]
      %v487 = vlaneseq
      %v488 = vshrl.u32 %v487, 7
      %v489 = vsub.s32 0, %v488
      %v490 = vrot.slane %v485, %v489
      %v492 = vadd.f32 %v477, %v490
      %v493 = vadd.f32 %v478, %v490
      %v494 = vadd.f32 %v479, %v490
      %v495 = vadd.f32 %v480, %v490
      %v496 = vadd.f32 %v481, %v490
      %v497 = vadd.f32 %v482, %v490
      %v498 = vadd.f32 %v483, %v490
      %v499 = vadd.f32 %v484, %v490
      %v500 = vpack.c.bf16 %v493, %v492
      %v501 = vpack.c.bf16 %v495, %v494
      %v502 = vpack.c.bf16 %v497, %v496
      %v503 = vpack.c.bf16 %v499, %v498
      %v504 = vld [vmem:[%s4] sm:$0xf]
      %v505 = vld [vmem:[%s4 + $0x4] sm:$0xf]
      %v506 = vld [vmem:[%s4 + $0x8] sm:$0xf]
      %v507 = vld [vmem:[%s4 + $0xc] sm:$0xf]
      %v508 = vld [vmem:[%s5] sm:$0x1]
      %v510 = vlaneseq
      %v511 = vshrl.u32 %v510, 7
      %v512 = vsub.s32 0, %v511
      %v513 = vrot.slane %v508, %v512
      %v519 = vunpack.c.l.b16 %v504
      %v520 = vunpack.c.l.b16 %v505
      %v521 = vunpack.c.l.b16 %v506
      %v522 = vunpack.c.l.b16 %v507
      %v523 = vpack.c.b16 %v520, %v519
      %v524 = vpack.c.b16 %v522, %v521
      %v528 = vsel %vm364, %v500, 0
      %v531 = vsel %vm364, %v501, 0
      %v534 = vsel %vm364, %v502, 0
      %v537 = vsel %vm364, %v503, 0
      %539 = vmatprep.subr.bf16.mxu0 0
      %540 = vmatpush1.bf16.msra.mxu0 0
      %541 = vmatprep.subr.bf16.mxu0 0
      %542 = vmatpush1.bf16.msra.mxu0 0
      %543 = vmatprep.subr.bf16.mxu0 0
      %544 = vmatpush1.bf16.msra.mxu0 0
      %545 = vmatprep.subr.bf16.mxu0 0
      %546 = vmatpush1.bf16.msra.mxu0 0
      %547 = vmatprep.subr.bf16.mxu0 0
      %548 = vmatpush1.bf16.msra.mxu0 0
      %549 = vmatprep.subr.bf16.mxu0 0
      %550 = vmatpush1.bf16.msra.mxu0 0
      %551 = vmatprep.subr.bf16.mxu0 0
      %552 = vmatpush1.bf16.msra.mxu0 %v524
      %553 = vmatprep.subr.bf16.mxu0 0
      %554 = vmatpush1.bf16.msra.mxu0 %v523
      %555 = vmatprep.subr.bf16.mxu0 0
      %556 = vmatpush2.bf16.msra.mxu0 0
      %557 = vmatprep.subr.bf16.mxu0 0
      %558 = vmatpush2.bf16.msra.mxu0 0
      %559 = vmatprep.subr.bf16.mxu0 0
      %560 = vmatpush2.bf16.msra.mxu0 0
      %561 = vmatprep.subr.bf16.mxu0 0
      %562 = vmatpush2.bf16.msra.mxu0 0
      %563 = vmatprep.subr.bf16.mxu0 0
      %564 = vmatpush2.bf16.msra.mxu0 0
      %565 = vmatprep.subr.bf16.mxu0 0
      %566 = vmatpush2.bf16.msra.mxu0 0
      %567 = vmatprep.subr.bf16.mxu0 0
      %568 = vmatpush2.bf16.msra.mxu0 0
      %569 = vmatprep.subr.bf16.mxu0 0
      %570 = vmatpush2.bf16.msra.mxu0 0
      %571 = vmatprep.mubr.bf16.mxu0 0
      %572 = vmatmul.mubr.bf16.gmra.mxu0 %v528
      %v573 = vpop.f32.mrf.mxu0
      %v574 = vadd.f32 %v513, %v573
      %v575 = vpop.f32.mrf.mxu0
      %v576 = vpop.f32.mrf.mxu0
      %v577 = vadd.f32 %v513, %v576
      %v578 = vpop.f32.mrf.mxu0
      %579 = vmatprep.mubr.bf16.mxu0 0
      %580 = vmatmul.mubr.bf16.gmra.mxu0 %v531
      %v581 = vpop.f32.mrf.mxu0
      %v582 = vadd.f32 %v513, %v581
      %v583 = vpop.f32.mrf.mxu0
      %v584 = vpop.f32.mrf.mxu0
      %v585 = vadd.f32 %v513, %v584
      %v586 = vpop.f32.mrf.mxu0
      %587 = vmatprep.mubr.bf16.mxu0 0
      %588 = vmatmul.mubr.bf16.gmra.mxu0 %v534
      %v589 = vpop.f32.mrf.mxu0
      %v590 = vadd.f32 %v513, %v589
      %v591 = vpop.f32.mrf.mxu0
      %v592 = vpop.f32.mrf.mxu0
      %v593 = vadd.f32 %v513, %v592
      %v594 = vpop.f32.mrf.mxu0
      %595 = vmatprep.mubr.bf16.mxu0 0
      %596 = vmatmul.mubr.bf16.gmra.mxu0 %v537
      %v597 = vpop.f32.mrf.mxu0
      %v598 = vadd.f32 %v513, %v597
      %v599 = vpop.f32.mrf.mxu0
      %v600 = vpop.f32.mrf.mxu0
      %v601 = vadd.f32 %v513, %v600
      %v602 = vpop.f32.mrf.mxu0
      %603 = vdwg.mxu0
      %v604 = vmul.f32 %v574, 0.5
      %v605 = vmul.f32 %v577, 0.5
      %v606 = vmul.f32 %v582, 0.5
      %v607 = vmul.f32 %v585, 0.5
      %v608 = vmul.f32 %v590, 0.5
      %v609 = vmul.f32 %v593, 0.5
      %v610 = vmul.f32 %v598, 0.5
      %v611 = vmul.f32 %v601, 0.5
      %v612 = vmul.f32 %v574, 0.70710677
      %v613 = vmul.f32 %v577, 0.70710677
      %v614 = vmul.f32 %v582, 0.70710677
      %v615 = vmul.f32 %v585, 0.70710677
      %v616 = vmul.f32 %v590, 0.70710677
      %v617 = vmul.f32 %v593, 0.70710677
      %v618 = vmul.f32 %v598, 0.70710677
      %v619 = vmul.f32 %v601, 0.70710677
      %v620 = verf.f32.pop %v612
      %v621 = verf.f32.pop %v613
      %v622 = verf.f32.pop %v614
      %v623 = verf.f32.pop %v615
      %v624 = verf.f32.pop %v616
      %v625 = verf.f32.pop %v617
      %v626 = verf.f32.pop %v618
      %v627 = verf.f32.pop %v619
      %v628 = vadd.f32 %v620, 1.0
      %v629 = vadd.f32 %v621, 1.0
      %v630 = vadd.f32 %v622, 1.0
      %v631 = vadd.f32 %v623, 1.0
      %v632 = vadd.f32 %v624, 1.0
      %v633 = vadd.f32 %v625, 1.0
      %v634 = vadd.f32 %v626, 1.0
      %v635 = vadd.f32 %v627, 1.0
      %v636 = vmul.f32 %v604, %v628
      %v637 = vmul.f32 %v605, %v629
      %v638 = vmul.f32 %v606, %v630
      %v639 = vmul.f32 %v607, %v631
      %v640 = vmul.f32 %v608, %v632
      %v641 = vmul.f32 %v609, %v633
      %v642 = vmul.f32 %v610, %v634
      %v643 = vmul.f32 %v611, %v635
      %v644 = vpack.c.bf16 %v637, %v636
      %v645 = vpack.c.bf16 %v639, %v638
      %v646 = vpack.c.bf16 %v641, %v640
      %v647 = vpack.c.bf16 %v643, %v642
      %v648 = vld [vmem:[%s6] sm:$0xf]
      %v649 = vld [vmem:[%s6 + $0x4] sm:$0xf]
      %v650 = vld [vmem:[%s6 + $0x8] sm:$0xf]
      %v651 = vld [vmem:[%s6 + $0xc] sm:$0xf]
      %v652 = vld [vmem:[%s6 + $0x10] sm:$0xf]
      %v653 = vld [vmem:[%s6 + $0x14] sm:$0xf]
      %v654 = vld [vmem:[%s6 + $0x18] sm:$0xf]
      %v655 = vld [vmem:[%s6 + $0x1c] sm:$0xf]
      %v656 = vld [vmem:[%s6 + $0x20] sm:$0xf]
      %v657 = vld [vmem:[%s6 + $0x24] sm:$0xf]
      %v658 = vld [vmem:[%s6 + $0x28] sm:$0xf]
      %v659 = vld [vmem:[%s6 + $0x2c] sm:$0xf]
      %v660 = vld [vmem:[%s6 + $0x30] sm:$0xf]
      %v661 = vld [vmem:[%s6 + $0x34] sm:$0xf]
      %v662 = vld [vmem:[%s6 + $0x38] sm:$0xf]
      %v663 = vld [vmem:[%s6 + $0x3c] sm:$0xf]
      %v664 = vld [vmem:[%s7] sm:$0x1]
      %v666 = vlaneseq
      %v667 = vshrl.u32 %v666, 7
      %v668 = vsub.s32 0, %v667
      %v669 = vrot.slane %v664, %v668
      %v687 = vunpack.c.l.b16 %v648
      %v688 = vunpack.c.l.b16 %v649
      %v689 = vunpack.c.l.b16 %v650
      %v690 = vunpack.c.l.b16 %v651
      %v691 = vunpack.c.l.b16 %v652
      %v692 = vunpack.c.l.b16 %v653
      %v693 = vunpack.c.l.b16 %v654
      %v694 = vunpack.c.l.b16 %v655
      %v695 = vunpack.c.l.b16 %v656
      %v696 = vunpack.c.l.b16 %v657
      %v697 = vunpack.c.l.b16 %v658
      %v698 = vunpack.c.l.b16 %v659
      %v699 = vunpack.c.l.b16 %v660
      %v700 = vunpack.c.l.b16 %v661
      %v701 = vunpack.c.l.b16 %v662
      %v702 = vunpack.c.l.b16 %v663
      %v703 = vpack.c.b16 %v688, %v687
      %v704 = vpack.c.b16 %v690, %v689
      %v705 = vpack.c.b16 %v692, %v691
      %v706 = vpack.c.b16 %v694, %v693
      %v707 = vpack.c.b16 %v696, %v695
      %v708 = vpack.c.b16 %v698, %v697
      %v709 = vpack.c.b16 %v700, %v699
      %v710 = vpack.c.b16 %v702, %v701
      %719 = vmatprep.subr.bf16.mxu0 0
      %720 = vmatpush1.bf16.msra.mxu0 %v710
      %721 = vmatprep.subr.bf16.mxu0 0
      %722 = vmatpush1.bf16.msra.mxu0 %v709
      %723 = vmatprep.subr.bf16.mxu0 0
      %724 = vmatpush1.bf16.msra.mxu0 %v708
      %725 = vmatprep.subr.bf16.mxu0 0
      %726 = vmatpush1.bf16.msra.mxu0 %v707
      %727 = vmatprep.subr.bf16.mxu0 0
      %728 = vmatpush1.bf16.msra.mxu0 %v706
      %729 = vmatprep.subr.bf16.mxu0 0
      %730 = vmatpush1.bf16.msra.mxu0 %v705
      %731 = vmatprep.subr.bf16.mxu0 0
      %732 = vmatpush1.bf16.msra.mxu0 %v704
      %733 = vmatprep.subr.bf16.mxu0 0
      %734 = vmatpush1.bf16.msra.mxu0 %v703
      %735 = vmatprep.subr.bf16.mxu0 0
      %736 = vmatpush2.bf16.msra.mxu0 0
      %737 = vmatprep.subr.bf16.mxu0 0
      %738 = vmatpush2.bf16.msra.mxu0 0
      %739 = vmatprep.subr.bf16.mxu0 0
      %740 = vmatpush2.bf16.msra.mxu0 0
      %741 = vmatprep.subr.bf16.mxu0 0
      %742 = vmatpush2.bf16.msra.mxu0 0
      %743 = vmatprep.subr.bf16.mxu0 0
      %744 = vmatpush2.bf16.msra.mxu0 0
      %745 = vmatprep.subr.bf16.mxu0 0
      %746 = vmatpush2.bf16.msra.mxu0 0
      %747 = vmatprep.subr.bf16.mxu0 0
      %748 = vmatpush2.bf16.msra.mxu0 0
      %749 = vmatprep.subr.bf16.mxu0 0
      %750 = vmatpush2.bf16.msra.mxu0 0
      %751 = vmatprep.mubr.bf16.mxu0 0
      %752 = vmatmul.mubr.bf16.gmra.mxu0 %v644
      %v753 = vpop.f32.mrf.mxu0
      %v754 = vadd.f32 %v669, %v753
      %v755 = vpop.f32.mrf.mxu0
      %v756 = vpop.f32.mrf.mxu0
      %v757 = vadd.f32 %v669, %v756
      %v758 = vpop.f32.mrf.mxu0
      %759 = vmatprep.mubr.bf16.mxu0 0
      %760 = vmatmul.mubr.bf16.gmra.mxu0 %v645
      %v761 = vpop.f32.mrf.mxu0
      %v762 = vadd.f32 %v669, %v761
      %v763 = vpop.f32.mrf.mxu0
      %v764 = vpop.f32.mrf.mxu0
      %v765 = vadd.f32 %v669, %v764
      %v766 = vpop.f32.mrf.mxu0
      %767 = vmatprep.mubr.bf16.mxu0 0
      %768 = vmatmul.mubr.bf16.gmra.mxu0 %v646
      %v769 = vpop.f32.mrf.mxu0
      %v770 = vadd.f32 %v669, %v769
      %v771 = vpop.f32.mrf.mxu0
      %v772 = vpop.f32.mrf.mxu0
      %v773 = vadd.f32 %v669, %v772
      %v774 = vpop.f32.mrf.mxu0
      %775 = vmatprep.mubr.bf16.mxu0 0
      %776 = vmatmul.mubr.bf16.gmra.mxu0 %v647
      %v777 = vpop.f32.mrf.mxu0
      %v778 = vadd.f32 %v669, %v777
      %v779 = vpop.f32.mrf.mxu0
      %v780 = vpop.f32.mrf.mxu0
      %v781 = vadd.f32 %v669, %v780
      %v782 = vpop.f32.mrf.mxu0
      %783 = vdwg.mxu0
      %v784 = vadd.f32 %v356, %v754
      %v785 = vadd.f32 %v357, %v757
      %v786 = vadd.f32 %v358, %v762
      %v787 = vadd.f32 %v359, %v765
      %v788 = vadd.f32 %v360, %v770
      %v789 = vadd.f32 %v361, %v773
      %v790 = vadd.f32 %v362, %v778
      %v791 = vadd.f32 %v363, %v781
      %792 = vst.msk [vmem:[%s329] sm:$0xff] %vm364, %v784
      %793 = vst.msk [vmem:[%s329 + $0x8] sm:$0xff] %vm364, %v785
      %794 = vst.msk [vmem:[%s329 + $0x10] sm:$0xff] %vm364, %v786
      %795 = vst.msk [vmem:[%s329 + $0x18] sm:$0xff] %vm364, %v787
      %796 = vst.msk [vmem:[%s329 + $0x20] sm:$0xff] %vm364, %v788
      %797 = vst.msk [vmem:[%s329 + $0x28] sm:$0xff] %vm364, %v789
      %798 = vst.msk [vmem:[%s329 + $0x30] sm:$0xff] %vm364, %v790
      %799 = vst.msk [vmem:[%s329 + $0x38] sm:$0xff] %vm364, %v791
      %s800 = smul.u32 8, %s19
      %p801 = scmp.lt.s32.totalorder %s800, 15
      %s802 = scalar_select %p801, %s800, 15
      %s803 = smul.addr %s802, 8
      %s804 = scalar_lea.vmem %s8, %s803
      // Predicated region
      $region53: #{stage_forward.5} parent=51 // pred_check
        %p805 = pneg %p215
      $region54: #{stage_forward.5} parent=51 // pred_check_branch
        %807 = sbr.rel (%p805) target = $region56
      $region55: #{stage_forward.5} parent=51 // pred_region
        %s808 = smul.u32 8, %s19
      $region56: #{stage_forward.5} parent=51 // pred_fallthru
        _
    $region52: #{stage_forward.5} parent=5 // pred_fallthru
      _
    %p809 = scmp.le.s32.totalorder 2, %s14
    // Predicated region
    $region57: #{stage_forward.5} parent=5 // pred_check
      %p810 = pneg %p809
    $region58: #{stage_forward.5} parent=5 // pred_check_branch
      %812 = sbr.rel (%p810) target = $region60
    $region59: #{stage_forward.5} parent=5 // pred_region
      %s813 = ssub.s32 %s14, 2
      // Predicated region
      $region61: #{stage_forward.5} parent=59 // pred_check
        %p814 = pneg %p221
      $region62: #{stage_forward.5} parent=59 // pred_check_branch
        %816 = sbr.rel (%p814) target = $region64
      $region63: #{stage_forward.5} parent=59 // pred_region
        %s817 = smul.u32 8, %s20
        %p818 = scmp.lt.s32.totalorder %s817, 15
        %s819 = scalar_select %p818, %s817, 15
        %s820 = smul.addr %s819, 8
        %s821 = scalar_lea.vmem %s8, %s820
      $region64: #{stage_forward.5} parent=59 // pred_fallthru
        _
    $region60: #{stage_forward.5} parent=5 // pred_fallthru
      _
  $region6: #{stage_forward.5} parent=0 // loop_footer
    %s18 = sadd.s32 1, %s14
  $region7: #{stage_forward.5} parent=0 // loop_footer_branch
    %13 = sbr.rel target = $region3
  $region8: #{stage_forward.5} parent=0 // loop_exit
    _

// kernel: stage_forward.4
$region0: #{stage_forward.4}
  #allocation0 [shape = 'u32[]', space=smem, size = 0x4, offset = 0x4, fixed_abs, tag = 'smem constant byte address 0x4 - core index']
  #allocation1 [shape = 'u32[144,128]{1,0:T(1,128)}', space=vmem, size = 0x12000, scoped, tag = 'internal scratch']
  %s0 = inlined_call_operand.vmem [shape: bf16[128,32], index: 0, kind: input, shape index: {}]
  %s1 = inlined_call_operand.vmem [shape: f32[1,32], index: 1, kind: input, shape index: {}]
  %s2 = inlined_call_operand.vmem [shape: f32[1,32], index: 2, kind: input, shape index: {}]
  %s3 = inlined_call_operand.vmem [shape: bf16[32,96], index: 3, kind: input, shape index: {}]
  %s4 = inlined_call_operand.vmem [shape: f32[1,96], index: 4, kind: input, shape index: {}]
  %s5 = inlined_call_operand.vmem [shape: bf16[32,32], index: 5, kind: input, shape index: {}]
  %s6 = inlined_call_operand.vmem [shape: f32[1,32], index: 6, kind: input, shape index: {}]
  %s7 = inlined_call_operand.vmem [shape: f32[2,16,16], index: 7, kind: input, shape index: {}]
  %s8 = inlined_call_operand.vmem [shape: bf16[128,32], index: 8, kind: output, shape index: {}]
  %s9 = sld [smem:[#allocation0]]
  $region65: #{stage_forward.4} parent=0
    _
  %s11 = ssub.s32 1, %s9
  %s12 = scalar_select 0, %s11, %s9
  loop: start=0, step=1, limit=4
  $region2: #{stage_forward.4} parent=0 // loop_pre_header
    _
  $region3: #{stage_forward.4} parent=0 // loop_header
    %s14 = sphi 0, %s18
    %p15 = scmp.ge.s32.totalorder %s14, 4
    %s24 = sphi 0, %s26
    %s27 = sphi 0, %s24
    %s28 = sphi 0, %s27
    %s44 = sphi 0, %s28
    %s48 = sphi 0, %s48
    %s50 = sphi 0, %s48
    %s51 = sphi 0, %s50
    %s65 = sphi 0, %s51
    %s69 = sphi 0, %s69
    %s71 = sphi 0, %s69
    %s72 = sphi 0, %s71
    %s86 = sphi 0, %s72
    %s90 = sphi 0, %s90
    %s92 = sphi 0, %s90
    %s93 = sphi 0, %s92
    %s107 = sphi 0, %s93
    %s111 = sphi 0, %s111
    %s113 = sphi 0, %s111
    %s114 = sphi 0, %s113
    %s128 = sphi 0, %s114
    %s132 = sphi 0, %s132
    %s134 = sphi 0, %s132
    %s135 = sphi 0, %s134
    %s149 = sphi 0, %s135
    %s153 = sphi 0, %s153
    %s155 = sphi 0, %s153
    %s156 = sphi 0, %s155
    %s170 = sphi 0, %s156
    %s174 = sphi 0, %s174
    %s176 = sphi 0, %s174
    %s177 = sphi 0, %s176
    %s191 = sphi 0, %s177
    %s197 = sphi 0, %s199
    %s200 = sphi 0, %s197
    %s201 = sphi 0, %s200
    %s217 = sphi 0, %s201
  $region4: #{stage_forward.4} parent=0 // loop_header_branch
    %17 = sbr.rel (%p15) target = $region8
  $region5: #{stage_forward.4} parent=0 // loop_body
    %s19 = ssub.s32 %s14, 1
    %s20 = ssub.s32 %s14, 2
    %s21 = sadd.s32 %s14, 1
    %s22 = ssub.s32 %s14, %s21
    %p23 = scmp.eq.s32.totalorder %s22, 0
    %s25 = sadd.s32 %s24, 1
    %s26 = scalar_select %p23, %s24, %s25
    %p29 = pneg %p23
    %p30 = scmp.eq.s32.totalorder %s14, 1
    %p31 = por %p29, %p30
    %p32 = scmp.ne.s32.totalorder %s24, %s27
    %p33 = scmp.eq.s32.totalorder %s14, 0
    %p34 = por %p32, %p33
    %p35 = scmp.ne.s32.totalorder %s24, %s27
    %p36 = scmp.eq.s32.totalorder %s19, 1
    %p37 = por %p35, %p36
    %p38 = scmp.ne.s32.totalorder %s27, %s28
    %p39 = scmp.eq.s32.totalorder %s19, 0
    %p40 = por %p38, %p39
    %p41 = scmp.ne.s32.totalorder %s27, %s28
    %p42 = scmp.eq.s32.totalorder %s20, 1
    %p43 = por %p41, %p42
    %p45 = scmp.ne.s32.totalorder %s28, %s44
    %p46 = scmp.eq.s32.totalorder %s20, 0
    %p47 = por %p45, %p46
    %s49 = sadd.s32 %s48, 1
    %p52 = scmp.eq.s32.totalorder %s14, 1
    %p53 = scmp.ne.s32.totalorder %s48, %s50
    %p54 = scmp.eq.s32.totalorder %s14, 0
    %p55 = por %p53, %p54
    %p56 = scmp.ne.s32.totalorder %s48, %s50
    %p57 = scmp.eq.s32.totalorder %s19, 1
    %p58 = por %p56, %p57
    %p59 = scmp.ne.s32.totalorder %s50, %s51
    %p60 = scmp.eq.s32.totalorder %s19, 0
    %p61 = por %p59, %p60
    %p62 = scmp.ne.s32.totalorder %s50, %s51
    %p63 = scmp.eq.s32.totalorder %s20, 1
    %p64 = por %p62, %p63
    %p66 = scmp.ne.s32.totalorder %s51, %s65
    %p67 = scmp.eq.s32.totalorder %s20, 0
    %p68 = por %p66, %p67
    %s70 = sadd.s32 %s69, 1
    %p73 = scmp.eq.s32.totalorder %s14, 1
    %p74 = scmp.ne.s32.totalorder %s69, %s71
    %p75 = scmp.eq.s32.totalorder %s14, 0
    %p76 = por %p74, %p75
    %p77 = scmp.ne.s32.totalorder %s69, %s71
    %p78 = scmp.eq.s32.totalorder %s19, 1
    %p79 = por %p77, %p78
    %p80 = scmp.ne.s32.totalorder %s71, %s72
    %p81 = scmp.eq.s32.totalorder %s19, 0
    %p82 = por %p80, %p81
    %p83 = scmp.ne.s32.totalorder %s71, %s72
    %p84 = scmp.eq.s32.totalorder %s20, 1
    %p85 = por %p83, %p84
    %p87 = scmp.ne.s32.totalorder %s72, %s86
    %p88 = scmp.eq.s32.totalorder %s20, 0
    %p89 = por %p87, %p88
    %s91 = sadd.s32 %s90, 1
    %p94 = scmp.eq.s32.totalorder %s14, 1
    %p95 = scmp.ne.s32.totalorder %s90, %s92
    %p96 = scmp.eq.s32.totalorder %s14, 0
    %p97 = por %p95, %p96
    %p98 = scmp.ne.s32.totalorder %s90, %s92
    %p99 = scmp.eq.s32.totalorder %s19, 1
    %p100 = por %p98, %p99
    %p101 = scmp.ne.s32.totalorder %s92, %s93
    %p102 = scmp.eq.s32.totalorder %s19, 0
    %p103 = por %p101, %p102
    %p104 = scmp.ne.s32.totalorder %s92, %s93
    %p105 = scmp.eq.s32.totalorder %s20, 1
    %p106 = por %p104, %p105
    %p108 = scmp.ne.s32.totalorder %s93, %s107
    %p109 = scmp.eq.s32.totalorder %s20, 0
    %p110 = por %p108, %p109
    %s112 = sadd.s32 %s111, 1
    %p115 = scmp.eq.s32.totalorder %s14, 1
    %p116 = scmp.ne.s32.totalorder %s111, %s113
    %p117 = scmp.eq.s32.totalorder %s14, 0
    %p118 = por %p116, %p117
    %p119 = scmp.ne.s32.totalorder %s111, %s113
    %p120 = scmp.eq.s32.totalorder %s19, 1
    %p121 = por %p119, %p120
    %p122 = scmp.ne.s32.totalorder %s113, %s114
    %p123 = scmp.eq.s32.totalorder %s19, 0
    %p124 = por %p122, %p123
    %p125 = scmp.ne.s32.totalorder %s113, %s114
    %p126 = scmp.eq.s32.totalorder %s20, 1
    %p127 = por %p125, %p126
    %p129 = scmp.ne.s32.totalorder %s114, %s128
    %p130 = scmp.eq.s32.totalorder %s20, 0
    %p131 = por %p129, %p130
    %s133 = sadd.s32 %s132, 1
    %p136 = scmp.eq.s32.totalorder %s14, 1
    %p137 = scmp.ne.s32.totalorder %s132, %s134
    %p138 = scmp.eq.s32.totalorder %s14, 0
    %p139 = por %p137, %p138
    %p140 = scmp.ne.s32.totalorder %s132, %s134
    %p141 = scmp.eq.s32.totalorder %s19, 1
    %p142 = por %p140, %p141
    %p143 = scmp.ne.s32.totalorder %s134, %s135
    %p144 = scmp.eq.s32.totalorder %s19, 0
    %p145 = por %p143, %p144
    %p146 = scmp.ne.s32.totalorder %s134, %s135
    %p147 = scmp.eq.s32.totalorder %s20, 1
    %p148 = por %p146, %p147
    %p150 = scmp.ne.s32.totalorder %s135, %s149
    %p151 = scmp.eq.s32.totalorder %s20, 0
    %p152 = por %p150, %p151
    %s154 = sadd.s32 %s153, 1
    %p157 = scmp.eq.s32.totalorder %s14, 1
    %p158 = scmp.ne.s32.totalorder %s153, %s155
    %p159 = scmp.eq.s32.totalorder %s14, 0
    %p160 = por %p158, %p159
    %p161 = scmp.ne.s32.totalorder %s153, %s155
    %p162 = scmp.eq.s32.totalorder %s19, 1
    %p163 = por %p161, %p162
    %p164 = scmp.ne.s32.totalorder %s155, %s156
    %p165 = scmp.eq.s32.totalorder %s19, 0
    %p166 = por %p164, %p165
    %p167 = scmp.ne.s32.totalorder %s155, %s156
    %p168 = scmp.eq.s32.totalorder %s20, 1
    %p169 = por %p167, %p168
    %p171 = scmp.ne.s32.totalorder %s156, %s170
    %p172 = scmp.eq.s32.totalorder %s20, 0
    %p173 = por %p171, %p172
    %s175 = sadd.s32 %s174, 1
    %p178 = scmp.eq.s32.totalorder %s14, 1
    %p179 = scmp.ne.s32.totalorder %s174, %s176
    %p180 = scmp.eq.s32.totalorder %s14, 0
    %p181 = por %p179, %p180
    %p182 = scmp.ne.s32.totalorder %s174, %s176
    %p183 = scmp.eq.s32.totalorder %s19, 1
    %p184 = por %p182, %p183
    %p185 = scmp.ne.s32.totalorder %s176, %s177
    %p186 = scmp.eq.s32.totalorder %s19, 0
    %p187 = por %p185, %p186
    %p188 = scmp.ne.s32.totalorder %s176, %s177
    %p189 = scmp.eq.s32.totalorder %s20, 1
    %p190 = por %p188, %p189
    %p192 = scmp.ne.s32.totalorder %s177, %s191
    %p193 = scmp.eq.s32.totalorder %s20, 0
    %p194 = por %p192, %p193
    %s195 = ssub.s32 %s14, %s21
    %p196 = scmp.eq.s32.totalorder %s195, 0
    %s198 = sadd.s32 %s197, 1
    %s199 = scalar_select %p196, %s197, %s198
    %p202 = pneg %p196
    %p203 = scmp.eq.s32.totalorder %s14, 1
    %p204 = por %p202, %p203
    %p205 = scmp.ne.s32.totalorder %s197, %s200
    %p206 = scmp.eq.s32.totalorder %s14, 0
    %p207 = por %p205, %p206
    %p208 = scmp.ne.s32.totalorder %s197, %s200
    %p209 = scmp.eq.s32.totalorder %s19, 1
    %p210 = por %p208, %p209
    %p211 = scmp.ne.s32.totalorder %s200, %s201
    %p212 = scmp.eq.s32.totalorder %s19, 0
    %p213 = por %p211, %p212
    %p214 = scmp.ne.s32.totalorder %s200, %s201
    %p215 = scmp.eq.s32.totalorder %s20, 1
    %p216 = por %p214, %p215
    %p218 = scmp.ne.s32.totalorder %s201, %s217
    %p219 = scmp.eq.s32.totalorder %s20, 0
    %p220 = por %p218, %p219
    %p221 = scmp.le.s32.totalorder 1, %s14
    %p222 = scmp.lt.s32.totalorder %s14, 3
    %p223 = pnand %p221, %p222
    %p224 = pneg %p223
    // Predicated region
    $region9: #{stage_forward.4} parent=5 // pred_check
      _
    $region10: #{stage_forward.4} parent=5 // pred_check_branch
      %226 = sbr.rel (%p223) target = $region12
    $region11: #{stage_forward.4} parent=5 // pred_region
      %s227 = ssub.s32 %s14, 1
      // Predicated region
      $region13: #{stage_forward.4} parent=11 // pred_check
        %p228 = pneg %p61
      $region14: #{stage_forward.4} parent=11 // pred_check_branch
        %230 = sbr.rel (%p228) target = $region16
      $region15: #{stage_forward.4} parent=11 // pred_region
        _
      $region16: #{stage_forward.4} parent=11 // pred_fallthru
        _
      // Predicated region
      $region17: #{stage_forward.4} parent=11 // pred_check
        %p231 = pneg %p82
      $region18: #{stage_forward.4} parent=11 // pred_check_branch
        %233 = sbr.rel (%p231) target = $region20
      $region19: #{stage_forward.4} parent=11 // pred_region
        _
      $region20: #{stage_forward.4} parent=11 // pred_fallthru
        _
      // Predicated region
      $region21: #{stage_forward.4} parent=11 // pred_check
        %p234 = pneg %p103
      $region22: #{stage_forward.4} parent=11 // pred_check_branch
        %236 = sbr.rel (%p234) target = $region24
      $region23: #{stage_forward.4} parent=11 // pred_region
        _
      $region24: #{stage_forward.4} parent=11 // pred_fallthru
        _
      // Predicated region
      $region25: #{stage_forward.4} parent=11 // pred_check
        %p237 = pneg %p124
      $region26: #{stage_forward.4} parent=11 // pred_check_branch
        %239 = sbr.rel (%p237) target = $region28
      $region27: #{stage_forward.4} parent=11 // pred_region
        _
      $region28: #{stage_forward.4} parent=11 // pred_fallthru
        _
      // Predicated region
      $region29: #{stage_forward.4} parent=11 // pred_check
        %p240 = pneg %p145
      $region30: #{stage_forward.4} parent=11 // pred_check_branch
        %242 = sbr.rel (%p240) target = $region32
      $region31: #{stage_forward.4} parent=11 // pred_region
        _
      $region32: #{stage_forward.4} parent=11 // pred_fallthru
        _
      // Predicated region
      $region33: #{stage_forward.4} parent=11 // pred_check
        %p243 = pneg %p166
      $region34: #{stage_forward.4} parent=11 // pred_check_branch
        %245 = sbr.rel (%p243) target = $region36
      $region35: #{stage_forward.4} parent=11 // pred_region
        _
      $region36: #{stage_forward.4} parent=11 // pred_fallthru
        _
      // Predicated region
      $region37: #{stage_forward.4} parent=11 // pred_check
        %p246 = pneg %p187
      $region38: #{stage_forward.4} parent=11 // pred_check_branch
        %248 = sbr.rel (%p246) target = $region40
      $region39: #{stage_forward.4} parent=11 // pred_region
        _
      $region40: #{stage_forward.4} parent=11 // pred_fallthru
        _
    $region12: #{stage_forward.4} parent=5 // pred_fallthru
      _
    %p249 = scmp.lt.s32.totalorder %s14, 2
    // Predicated region
    $region41: #{stage_forward.4} parent=5 // pred_check
      %p250 = pneg %p249
    $region42: #{stage_forward.4} parent=5 // pred_check_branch
      %252 = sbr.rel (%p250) target = $region44
    $region43: #{stage_forward.4} parent=5 // pred_region
      // Predicated region
      $region45: #{stage_forward.4} parent=43 // pred_check
        %p253 = pneg %p34
      $region46: #{stage_forward.4} parent=43 // pred_check_branch
        %255 = sbr.rel (%p253) target = $region48
      $region47: #{stage_forward.4} parent=43 // pred_region
        %s256 = smul.u32 8, %s14
        %p257 = scmp.lt.s32.totalorder %s256, 15
        %s258 = scalar_select %p257, %s256, 15
        %s259 = smul.addr %s258, 4
        %s260 = scalar_lea.vmem %s0, %s259
        %s261 = smul.u32 8, %s14
      $region48: #{stage_forward.4} parent=43 // pred_fallthru
        _
    $region44: #{stage_forward.4} parent=5 // pred_fallthru
      _
    %p262 = scmp.le.s32.totalorder 1, %s14
    %p263 = scmp.lt.s32.totalorder %s14, 3
    %p264 = pnand %p262, %p263
    %p265 = pneg %p264
    // Predicated region
    $region49: #{stage_forward.4} parent=5 // pred_check
      _
    $region50: #{stage_forward.4} parent=5 // pred_check_branch
      %267 = sbr.rel (%p264) target = $region52
    $region51: #{stage_forward.4} parent=5 // pred_region
      %s268 = ssub.s32 %s14, 1
      %s269 = smul.u32 8, %s19
      %p270 = scmp.lt.s32.totalorder %s269, 15
      %s271 = scalar_select %p270, %s269, 15
      %s272 = smul.addr %s271, 4
      %s273 = scalar_lea.vmem %s0, %s272
      %p274 = pneg %p40
      %p275 = pneg %p37
      %p276 = pneg %p61
      %p277 = pneg %p58
      %p278 = pneg %p82
      %p279 = pneg %p79
      %p280 = pneg %p103
      %p281 = pneg %p100
      %p282 = pneg %p124
      %p283 = pneg %p121
      %p284 = pneg %p145
      %p285 = pneg %p142
      %p286 = pneg %p166
      %p287 = pneg %p163
      %p288 = pneg %p187
      %p289 = pneg %p184
      %p290 = pneg %p213
      %p291 = pneg %p210
      %s292 = smul.u32 8, %s19
      %p293 = scmp.lt.s32.totalorder %s292, 15
      %s294 = scalar_select %p293, %s292, 15
      %s295 = smul.addr %s294, 4
      %s296 = scalar_lea.vmem %s8, %s295
      %s297 = smul.u32 8, %s19
      %p298 = scmp.lt.s32.totalorder %s297, 15
      %s299 = scalar_select %p298, %s297, 15
      %s300 = smul.addr %s299, 4
      %s301 = scalar_lea.vmem %s0, %s300
      %s302 = smul.u32 8, %s19
      %s303 = smul.u32 8, %s19
      %p304 = scmp.lt.s32.totalorder %s303, 15
      %s305 = scalar_select %p304, %s303, 15
      %s306 = smul.addr %s305, 4
      %s307 = scalar_lea.vmem %s8, %s306
      %s308 = smul.u32 8, %s19
      %v310 = vld [vmem:[%s301] sm:$0xf]
      %v311 = vld [vmem:[%s301 + $0x4] sm:$0xf]
      %v312 = vld [vmem:[%s301 + $0x8] sm:$0xf]
      %v313 = vld [vmem:[%s301 + $0xc] sm:$0xf]
      %v314 = vld [vmem:[%s301 + $0x10] sm:$0xf]
      %v315 = vld [vmem:[%s301 + $0x14] sm:$0xf]
      %v316 = vld [vmem:[%s301 + $0x18] sm:$0xf]
      %v317 = vld [vmem:[%s301 + $0x1c] sm:$0xf]
      %v318 = vunpack.c.l.bf16 %v310
      %v319 = vunpack.c.l.bf16 %v311
      %v320 = vunpack.c.l.bf16 %v312
      %v321 = vunpack.c.l.bf16 %v313
      %v322 = vunpack.c.l.bf16 %v314
      %v323 = vunpack.c.l.bf16 %v315
      %v324 = vunpack.c.l.bf16 %v316
      %v325 = vunpack.c.l.bf16 %v317
      %vm326 = vcmask 261120
      %v327 = vsel %vm326, %v318, 0.0
      %328 = vadd.xlane.f32.xlu0 %v327
      %v329 = vpop.xlane.xlu0 %328
      %v330 = vsel %vm326, %v319, 0.0
      %331 = vadd.xlane.f32.xlu0 %v330
      %v332 = vpop.xlane.xlu0 %331
      %v333 = vsel %vm326, %v320, 0.0
      %334 = vadd.xlane.f32.xlu0 %v333
      %v335 = vpop.xlane.xlu0 %334
      %v336 = vsel %vm326, %v321, 0.0
      %337 = vadd.xlane.f32.xlu0 %v336
      %v338 = vpop.xlane.xlu0 %337
      %v339 = vsel %vm326, %v322, 0.0
      %340 = vadd.xlane.f32.xlu0 %v339
      %v341 = vpop.xlane.xlu0 %340
      %v342 = vsel %vm326, %v323, 0.0
      %343 = vadd.xlane.f32.xlu0 %v342
      %v344 = vpop.xlane.xlu0 %343
      %v345 = vsel %vm326, %v324, 0.0
      %346 = vadd.xlane.f32.xlu0 %v345
      %v347 = vpop.xlane.xlu0 %346
      %v348 = vsel %vm326, %v325, 0.0
      %349 = vadd.xlane.f32.xlu0 %v348
      %v350 = vpop.xlane.xlu0 %349
      %v351 = vrcp.pop 32.0
      %v352 = vmul.f32 %v329, %v351
      %v353 = vmul.f32 %v332, %v351
      %v354 = vmul.f32 %v335, %v351
      %v355 = vmul.f32 %v338, %v351
      %v356 = vmul.f32 %v341, %v351
      %v357 = vmul.f32 %v344, %v351
      %v358 = vmul.f32 %v347, %v351
      %v359 = vmul.f32 %v350, %v351
      %v360 = vsub.f32 %v318, %v352
      %v361 = vsub.f32 %v319, %v353
      %v362 = vsub.f32 %v320, %v354
      %v363 = vsub.f32 %v321, %v355
      %v364 = vsub.f32 %v322, %v356
      %v365 = vsub.f32 %v323, %v357
      %v366 = vsub.f32 %v324, %v358
      %v367 = vsub.f32 %v325, %v359
      %v368 = vmul.f32 %v360, %v360
      %v369 = vmul.f32 %v361, %v361
      %v370 = vmul.f32 %v362, %v362
      %v371 = vmul.f32 %v363, %v363
      %v372 = vmul.f32 %v364, %v364
      %v373 = vmul.f32 %v365, %v365
      %v374 = vmul.f32 %v366, %v366
      %v375 = vmul.f32 %v367, %v367
      %v376 = vsel %vm326, %v368, 0.0
      %377 = vadd.xlane.f32.xlu0 %v376
      %v378 = vpop.xlane.xlu0 %377
      %v379 = vsel %vm326, %v369, 0.0
      %380 = vadd.xlane.f32.xlu0 %v379
      %v381 = vpop.xlane.xlu0 %380
      %v382 = vsel %vm326, %v370, 0.0
      %383 = vadd.xlane.f32.xlu0 %v382
      %v384 = vpop.xlane.xlu0 %383
      %v385 = vsel %vm326, %v371, 0.0
      %386 = vadd.xlane.f32.xlu0 %v385
      %v387 = vpop.xlane.xlu0 %386
      %v388 = vsel %vm326, %v372, 0.0
      %389 = vadd.xlane.f32.xlu0 %v388
      %v390 = vpop.xlane.xlu0 %389
      %v391 = vsel %vm326, %v373, 0.0
      %392 = vadd.xlane.f32.xlu0 %v391
      %v393 = vpop.xlane.xlu0 %392
      %v394 = vsel %vm326, %v374, 0.0
      %395 = vadd.xlane.f32.xlu0 %v394
      %v396 = vpop.xlane.xlu0 %395
      %v397 = vsel %vm326, %v375, 0.0
      %398 = vadd.xlane.f32.xlu0 %v397
      %v399 = vpop.xlane.xlu0 %398
      %v400 = vmul.f32 %v378, %v351
      %v401 = vmul.f32 %v381, %v351
      %v402 = vmul.f32 %v384, %v351
      %v403 = vmul.f32 %v387, %v351
      %v404 = vmul.f32 %v390, %v351
      %v405 = vmul.f32 %v393, %v351
      %v406 = vmul.f32 %v396, %v351
      %v407 = vmul.f32 %v399, %v351
      %v408 = vadd.f32 %v400, 1e-05
      %v409 = vadd.f32 %v401, 1e-05
      %v410 = vadd.f32 %v402, 1e-05
      %v411 = vadd.f32 %v403, 1e-05
      %v412 = vadd.f32 %v404, 1e-05
      %v413 = vadd.f32 %v405, 1e-05
      %v414 = vadd.f32 %v406, 1e-05
      %v415 = vadd.f32 %v407, 1e-05
      %v416 = vrsqrt.pop %v408
      %v417 = vrsqrt.pop %v409
      %v418 = vrsqrt.pop %v410
      %v419 = vrsqrt.pop %v411
      %v420 = vrsqrt.pop %v412
      %v421 = vrsqrt.pop %v413
      %v422 = vrsqrt.pop %v414
      %v423 = vrsqrt.pop %v415
      %v424 = vmul.f32 %v360, %v416
      %v425 = vmul.f32 %v361, %v417
      %v426 = vmul.f32 %v362, %v418
      %v427 = vmul.f32 %v363, %v419
      %v428 = vmul.f32 %v364, %v420
      %v429 = vmul.f32 %v365, %v421
      %v430 = vmul.f32 %v366, %v422
      %v431 = vmul.f32 %v367, %v423
      %v432 = vld [vmem:[%s1] sm:$0x1]
      %v434 = vlaneseq
      %v435 = vshrl.u32 %v434, 7
      %v436 = vsub.s32 0, %v435
      %v437 = vrot.slane %v432, %v436
      %v439 = vmul.f32 %v424, %v437
      %v440 = vmul.f32 %v425, %v437
      %v441 = vmul.f32 %v426, %v437
      %v442 = vmul.f32 %v427, %v437
      %v443 = vmul.f32 %v428, %v437
      %v444 = vmul.f32 %v429, %v437
      %v445 = vmul.f32 %v430, %v437
      %v446 = vmul.f32 %v431, %v437
      %v447 = vld [vmem:[%s2] sm:$0x1]
      %v449 = vlaneseq
      %v450 = vshrl.u32 %v449, 7
      %v451 = vsub.s32 0, %v450
      %v452 = vrot.slane %v447, %v451
      %v454 = vadd.f32 %v439, %v452
      %v455 = vadd.f32 %v440, %v452
      %v456 = vadd.f32 %v441, %v452
      %v457 = vadd.f32 %v442, %v452
      %v458 = vadd.f32 %v443, %v452
      %v459 = vadd.f32 %v444, %v452
      %v460 = vadd.f32 %v445, %v452
      %v461 = vadd.f32 %v446, %v452
      %v462 = vpack.c.bf16 %v455, %v454
      %v463 = vpack.c.bf16 %v457, %v456
      %v464 = vpack.c.bf16 %v459, %v458
      %v465 = vpack.c.bf16 %v461, %v460
      %v466 = vld [vmem:[%s3] sm:$0xf]
      %v467 = vld [vmem:[%s3 + $0x4] sm:$0xf]
      %v468 = vld [vmem:[%s3 + $0x8] sm:$0xf]
      %v469 = vld [vmem:[%s3 + $0xc] sm:$0xf]
      %v470 = vld [vmem:[%s4] sm:$0x1]
      %v472 = vlaneseq
      %v473 = vshrl.u32 %v472, 7
      %v474 = vsub.s32 0, %v473
      %v475 = vrot.slane %v470, %v474
      %v481 = vunpack.c.l.b16 %v466
      %v482 = vunpack.c.l.b16 %v467
      %v483 = vunpack.c.l.b16 %v468
      %v484 = vunpack.c.l.b16 %v469
      %v485 = vpack.c.b16 %v482, %v481
      %v486 = vpack.c.b16 %v484, %v483
      %v490 = vsel %vm326, %v462, 0
      %v493 = vsel %vm326, %v463, 0
      %v496 = vsel %vm326, %v464, 0
      %v499 = vsel %vm326, %v465, 0
      %501 = vmatprep.subr.bf16.mxu0 0
      %502 = vmatpush1.bf16.msra.mxu0 0
      %503 = vmatprep.subr.bf16.mxu0 0
      %504 = vmatpush1.bf16.msra.mxu0 0
      %505 = vmatprep.subr.bf16.mxu0 0
      %506 = vmatpush1.bf16.msra.mxu0 0
      %507 = vmatprep.subr.bf16.mxu0 0
      %508 = vmatpush1.bf16.msra.mxu0 0
      %509 = vmatprep.subr.bf16.mxu0 0
      %510 = vmatpush1.bf16.msra.mxu0 0
      %511 = vmatprep.subr.bf16.mxu0 0
      %512 = vmatpush1.bf16.msra.mxu0 0
      %513 = vmatprep.subr.bf16.mxu0 0
      %514 = vmatpush1.bf16.msra.mxu0 %v486
      %515 = vmatprep.subr.bf16.mxu0 0
      %516 = vmatpush1.bf16.msra.mxu0 %v485
      %517 = vmatprep.subr.bf16.mxu0 0
      %518 = vmatpush2.bf16.msra.mxu0 0
      %519 = vmatprep.subr.bf16.mxu0 0
      %520 = vmatpush2.bf16.msra.mxu0 0
      %521 = vmatprep.subr.bf16.mxu0 0
      %522 = vmatpush2.bf16.msra.mxu0 0
      %523 = vmatprep.subr.bf16.mxu0 0
      %524 = vmatpush2.bf16.msra.mxu0 0
      %525 = vmatprep.subr.bf16.mxu0 0
      %526 = vmatpush2.bf16.msra.mxu0 0
      %527 = vmatprep.subr.bf16.mxu0 0
      %528 = vmatpush2.bf16.msra.mxu0 0
      %529 = vmatprep.subr.bf16.mxu0 0
      %530 = vmatpush2.bf16.msra.mxu0 0
      %531 = vmatprep.subr.bf16.mxu0 0
      %532 = vmatpush2.bf16.msra.mxu0 0
      %533 = vmatprep.mubr.bf16.mxu0 0
      %534 = vmatmul.mubr.bf16.gmra.mxu0 %v490
      %v535 = vpop.f32.mrf.mxu0
      %v536 = vadd.f32 %v475, %v535
      %v537 = vpop.f32.mrf.mxu0
      %v538 = vpop.f32.mrf.mxu0
      %v539 = vadd.f32 %v475, %v538
      %v540 = vpop.f32.mrf.mxu0
      %541 = vmatprep.mubr.bf16.mxu0 0
      %542 = vmatmul.mubr.bf16.gmra.mxu0 %v493
      %v543 = vpop.f32.mrf.mxu0
      %v544 = vadd.f32 %v475, %v543
      %v545 = vpop.f32.mrf.mxu0
      %v546 = vpop.f32.mrf.mxu0
      %v547 = vadd.f32 %v475, %v546
      %v548 = vpop.f32.mrf.mxu0
      %549 = vmatprep.mubr.bf16.mxu0 0
      %550 = vmatmul.mubr.bf16.gmra.mxu0 %v496
      %v551 = vpop.f32.mrf.mxu0
      %v552 = vadd.f32 %v475, %v551
      %v553 = vpop.f32.mrf.mxu0
      %v554 = vpop.f32.mrf.mxu0
      %v555 = vadd.f32 %v475, %v554
      %v556 = vpop.f32.mrf.mxu0
      %557 = vmatprep.mubr.bf16.mxu0 0
      %558 = vmatmul.mubr.bf16.gmra.mxu0 %v499
      %v559 = vpop.f32.mrf.mxu0
      %v560 = vadd.f32 %v475, %v559
      %v561 = vpop.f32.mrf.mxu0
      %v562 = vpop.f32.mrf.mxu0
      %v563 = vadd.f32 %v475, %v562
      %v564 = vpop.f32.mrf.mxu0
      %565 = vdwg.mxu0
      %v566 = vpack.c.bf16 %v539, %v536
      %v567 = vpack.c.bf16 %v547, %v544
      %v568 = vpack.c.bf16 %v555, %v552
      %v569 = vpack.c.bf16 %v563, %v560
      %574 = vrot.lane.b32.xlu0 %v566, 112
      %v575 = vpop.permute.xlu0 %574
      %576 = vrot.lane.b32.xlu0 %v567, 112
      %v577 = vpop.permute.xlu0 %576
      %578 = vrot.lane.b32.xlu0 %v568, 112
      %v579 = vpop.permute.xlu0 %578
      %580 = vrot.lane.b32.xlu0 %v569, 112
      %v581 = vpop.permute.xlu0 %580
      %582 = vrot.lane.b32.xlu0 %v566, 96
      %v583 = vpop.permute.xlu0 %582
      %vm584 = vcmask 130048
      %v586 = vsel %vm584, %v566, 0
      %v589 = vsel %vm584, %v583, 0
      %591 = vmatprep.subr.bf16.mxu0 0
      %592 = vmatpush1.bf16.xpose.msra.mxu0 0
      %593 = vmatprep.subr.bf16.mxu0 0
      %594 = vmatpush1.bf16.xpose.msra.mxu0 0
      %595 = vmatprep.subr.bf16.mxu0 0
      %596 = vmatpush1.bf16.xpose.msra.mxu0 0
      %597 = vmatprep.subr.bf16.mxu0 0
      %598 = vmatpush1.bf16.xpose.msra.mxu0 0
      %599 = vmatprep.subr.bf16.mxu0 0
      %600 = vmatpush1.bf16.xpose.msra.mxu0 0
      %601 = vmatprep.subr.bf16.mxu0 0
      %602 = vmatpush1.bf16.xpose.msra.mxu0 0
      %603 = vmatprep.subr.bf16.mxu0 0
      %604 = vmatpush1.bf16.xpose.msra.mxu0 0
      %605 = vmatprep.subr.bf16.mxu0 0
      %606 = vmatpush1.bf16.xpose.msra.mxu0 %v589
      %607 = vmatprep.subr.bf16.mxu0 0
      %608 = vmatpush2.bf16.xpose.msra.mxu0 0
      %609 = vmatprep.subr.bf16.mxu0 0
      %610 = vmatpush2.bf16.xpose.msra.mxu0 0
      %611 = vmatprep.subr.bf16.mxu0 0
      %612 = vmatpush2.bf16.xpose.msra.mxu0 0
      %613 = vmatprep.subr.bf16.mxu0 0
      %614 = vmatpush2.bf16.xpose.msra.mxu0 0
      %615 = vmatprep.subr.bf16.mxu0 0
      %616 = vmatpush2.bf16.xpose.msra.mxu0 0
      %617 = vmatprep.subr.bf16.mxu0 0
      %618 = vmatpush2.bf16.xpose.msra.mxu0 0
      %619 = vmatprep.subr.bf16.mxu0 0
      %620 = vmatpush2.bf16.xpose.msra.mxu0 0
      %621 = vmatprep.subr.bf16.mxu0 0
      %622 = vmatpush2.bf16.xpose.msra.mxu0 0
      %623 = vmatprep.mubr.bf16.mxu0 0
      %624 = vmatmul.mubr.bf16.gmra.mxu0 %v586
      %v625 = vpop.f32.mrf.mxu0
      %v626 = vadd.f32 0.0, %v625
      %v627 = vpop.f32.mrf.mxu0
      %v628 = vpop.f32.mrf.mxu0
      %v629 = vadd.f32 0.0, %v628
      %v630 = vpop.f32.mrf.mxu0
      %631 = vdwg.mxu0
      %632 = vrot.lane.b32.xlu0 %v567, 96
      %v633 = vpop.permute.xlu0 %632
      %v635 = vsel %vm584, %v567, 0
      %v638 = vsel %vm584, %v633, 0
      %640 = vmatprep.subr.bf16.mxu0 0
      %641 = vmatpush1.bf16.xpose.msra.mxu0 0
      %642 = vmatprep.subr.bf16.mxu0 0
      %643 = vmatpush1.bf16.xpose.msra.mxu0 0
      %644 = vmatprep.subr.bf16.mxu0 0
      %645 = vmatpush1.bf16.xpose.msra.mxu0 0
      %646 = vmatprep.subr.bf16.mxu0 0
      %647 = vmatpush1.bf16.xpose.msra.mxu0 0
      %648 = vmatprep.subr.bf16.mxu0 0
      %649 = vmatpush1.bf16.xpose.msra.mxu0 0
      %650 = vmatprep.subr.bf16.mxu0 0
      %651 = vmatpush1.bf16.xpose.msra.mxu0 0
      %652 = vmatprep.subr.bf16.mxu0 0
      %653 = vmatpush1.bf16.xpose.msra.mxu0 0
      %654 = vmatprep.subr.bf16.mxu0 0
      %655 = vmatpush1.bf16.xpose.msra.mxu0 %v638
      %656 = vmatprep.subr.bf16.mxu0 0
      %657 = vmatpush2.bf16.xpose.msra.mxu0 0
      %658 = vmatprep.subr.bf16.mxu0 0
      %659 = vmatpush2.bf16.xpose.msra.mxu0 0
      %660 = vmatprep.subr.bf16.mxu0 0
      %661 = vmatpush2.bf16.xpose.msra.mxu0 0
      %662 = vmatprep.subr.bf16.mxu0 0
      %663 = vmatpush2.bf16.xpose.msra.mxu0 0
      %664 = vmatprep.subr.bf16.mxu0 0
      %665 = vmatpush2.bf16.xpose.msra.mxu0 0
      %666 = vmatprep.subr.bf16.mxu0 0
      %667 = vmatpush2.bf16.xpose.msra.mxu0 0
      %668 = vmatprep.subr.bf16.mxu0 0
      %669 = vmatpush2.bf16.xpose.msra.mxu0 0
      %670 = vmatprep.subr.bf16.mxu0 0
      %671 = vmatpush2.bf16.xpose.msra.mxu0 0
      %672 = vmatprep.mubr.bf16.mxu0 0
      %673 = vmatmul.mubr.bf16.gmra.mxu0 %v635
      %v674 = vpop.f32.mrf.mxu0
      %v675 = vadd.f32 0.0, %v674
      %v676 = vpop.f32.mrf.mxu0
      %v677 = vpop.f32.mrf.mxu0
      %v678 = vadd.f32 0.0, %v677
      %v679 = vpop.f32.mrf.mxu0
      %680 = vdwg.mxu0
      %681 = vrot.lane.b32.xlu0 %v568, 96
      %v682 = vpop.permute.xlu0 %681
      %v684 = vsel %vm584, %v568, 0
      %v687 = vsel %vm584, %v682, 0
      %689 = vmatprep.subr.bf16.mxu0 0
      %690 = vmatpush1.bf16.xpose.msra.mxu0 0
      %691 = vmatprep.subr.bf16.mxu0 0
      %692 = vmatpush1.bf16.xpose.msra.mxu0 0
      %693 = vmatprep.subr.bf16.mxu0 0
      %694 = vmatpush1.bf16.xpose.msra.mxu0 0
      %695 = vmatprep.subr.bf16.mxu0 0
      %696 = vmatpush1.bf16.xpose.msra.mxu0 0
      %697 = vmatprep.subr.bf16.mxu0 0
      %698 = vmatpush1.bf16.xpose.msra.mxu0 0
      %699 = vmatprep.subr.bf16.mxu0 0
      %700 = vmatpush1.bf16.xpose.msra.mxu0 0
      %701 = vmatprep.subr.bf16.mxu0 0
      %702 = vmatpush1.bf16.xpose.msra.mxu0 0
      %703 = vmatprep.subr.bf16.mxu0 0
      %704 = vmatpush1.bf16.xpose.msra.mxu0 %v687
      %705 = vmatprep.subr.bf16.mxu0 0
      %706 = vmatpush2.bf16.xpose.msra.mxu0 0
      %707 = vmatprep.subr.bf16.mxu0 0
      %708 = vmatpush2.bf16.xpose.msra.mxu0 0
      %709 = vmatprep.subr.bf16.mxu0 0
      %710 = vmatpush2.bf16.xpose.msra.mxu0 0
      %711 = vmatprep.subr.bf16.mxu0 0
      %712 = vmatpush2.bf16.xpose.msra.mxu0 0
      %713 = vmatprep.subr.bf16.mxu0 0
      %714 = vmatpush2.bf16.xpose.msra.mxu0 0
      %715 = vmatprep.subr.bf16.mxu0 0
      %716 = vmatpush2.bf16.xpose.msra.mxu0 0
      %717 = vmatprep.subr.bf16.mxu0 0
      %718 = vmatpush2.bf16.xpose.msra.mxu0 0
      %719 = vmatprep.subr.bf16.mxu0 0
      %720 = vmatpush2.bf16.xpose.msra.mxu0 0
      %721 = vmatprep.mubr.bf16.mxu0 0
      %722 = vmatmul.mubr.bf16.gmra.mxu0 %v684
      %v723 = vpop.f32.mrf.mxu0
      %v724 = vadd.f32 0.0, %v723
      %v725 = vpop.f32.mrf.mxu0
      %v726 = vpop.f32.mrf.mxu0
      %v727 = vadd.f32 0.0, %v726
      %v728 = vpop.f32.mrf.mxu0
      %729 = vdwg.mxu0
      %730 = vrot.lane.b32.xlu0 %v569, 96
      %v731 = vpop.permute.xlu0 %730
      %v733 = vsel %vm584, %v569, 0
      %v736 = vsel %vm584, %v731, 0
      %738 = vmatprep.subr.bf16.mxu0 0
      %739 = vmatpush1.bf16.xpose.msra.mxu0 0
      %740 = vmatprep.subr.bf16.mxu0 0
      %741 = vmatpush1.bf16.xpose.msra.mxu0 0
      %742 = vmatprep.subr.bf16.mxu0 0
      %743 = vmatpush1.bf16.xpose.msra.mxu0 0
      %744 = vmatprep.subr.bf16.mxu0 0
      %745 = vmatpush1.bf16.xpose.msra.mxu0 0
      %746 = vmatprep.subr.bf16.mxu0 0
      %747 = vmatpush1.bf16.xpose.msra.mxu0 0
      %748 = vmatprep.subr.bf16.mxu0 0
      %749 = vmatpush1.bf16.xpose.msra.mxu0 0
      %750 = vmatprep.subr.bf16.mxu0 0
      %751 = vmatpush1.bf16.xpose.msra.mxu0 0
      %752 = vmatprep.subr.bf16.mxu0 0
      %753 = vmatpush1.bf16.xpose.msra.mxu0 %v736
      %754 = vmatprep.subr.bf16.mxu0 0
      %755 = vmatpush2.bf16.xpose.msra.mxu0 0
      %756 = vmatprep.subr.bf16.mxu0 0
      %757 = vmatpush2.bf16.xpose.msra.mxu0 0
      %758 = vmatprep.subr.bf16.mxu0 0
      %759 = vmatpush2.bf16.xpose.msra.mxu0 0
      %760 = vmatprep.subr.bf16.mxu0 0
      %761 = vmatpush2.bf16.xpose.msra.mxu0 0
      %762 = vmatprep.subr.bf16.mxu0 0
      %763 = vmatpush2.bf16.xpose.msra.mxu0 0
      %764 = vmatprep.subr.bf16.mxu0 0
      %765 = vmatpush2.bf16.xpose.msra.mxu0 0
      %766 = vmatprep.subr.bf16.mxu0 0
      %767 = vmatpush2.bf16.xpose.msra.mxu0 0
      %768 = vmatprep.subr.bf16.mxu0 0
      %769 = vmatpush2.bf16.xpose.msra.mxu0 0
      %770 = vmatprep.mubr.bf16.mxu0 0
      %771 = vmatmul.mubr.bf16.gmra.mxu0 %v733
      %v772 = vpop.f32.mrf.mxu0
      %v773 = vadd.f32 0.0, %v772
      %v774 = vpop.f32.mrf.mxu0
      %v775 = vpop.f32.mrf.mxu0
      %v776 = vadd.f32 0.0, %v775
      %v777 = vpop.f32.mrf.mxu0
      %778 = vdwg.mxu0
      %779 = vrot.lane.b32.xlu0 %v575, 96
      %v780 = vpop.permute.xlu0 %779
      %v782 = vsel %vm584, %v575, 0
      %v785 = vsel %vm584, %v780, 0
      %787 = vmatprep.subr.bf16.mxu0 0
      %788 = vmatpush1.bf16.xpose.msra.mxu0 0
      %789 = vmatprep.subr.bf16.mxu0 0
      %790 = vmatpush1.bf16.xpose.msra.mxu0 0
      %791 = vmatprep.subr.bf16.mxu0 0
      %792 = vmatpush1.bf16.xpose.msra.mxu0 0
      %793 = vmatprep.subr.bf16.mxu0 0
      %794 = vmatpush1.bf16.xpose.msra.mxu0 0
      %795 = vmatprep.subr.bf16.mxu0 0
      %796 = vmatpush1.bf16.xpose.msra.mxu0 0
      %797 = vmatprep.subr.bf16.mxu0 0
      %798 = vmatpush1.bf16.xpose.msra.mxu0 0
      %799 = vmatprep.subr.bf16.mxu0 0
      %800 = vmatpush1.bf16.xpose.msra.mxu0 0
      %801 = vmatprep.subr.bf16.mxu0 0
      %802 = vmatpush1.bf16.xpose.msra.mxu0 %v785
      %803 = vmatprep.subr.bf16.mxu0 0
      %804 = vmatpush2.bf16.xpose.msra.mxu0 0
      %805 = vmatprep.subr.bf16.mxu0 0
      %806 = vmatpush2.bf16.xpose.msra.mxu0 0
      %807 = vmatprep.subr.bf16.mxu0 0
      %808 = vmatpush2.bf16.xpose.msra.mxu0 0
      %809 = vmatprep.subr.bf16.mxu0 0
      %810 = vmatpush2.bf16.xpose.msra.mxu0 0
      %811 = vmatprep.subr.bf16.mxu0 0
      %812 = vmatpush2.bf16.xpose.msra.mxu0 0
      %813 = vmatprep.subr.bf16.mxu0 0
      %814 = vmatpush2.bf16.xpose.msra.mxu0 0
      %815 = vmatprep.subr.bf16.mxu0 0
      %816 = vmatpush2.bf16.xpose.msra.mxu0 0
      %817 = vmatprep.subr.bf16.mxu0 0
      %818 = vmatpush2.bf16.xpose.msra.mxu0 0
      %819 = vmatprep.mubr.bf16.mxu0 0
      %820 = vmatmul.mubr.bf16.gmra.mxu0 %v782
      %v821 = vpop.f32.mrf.mxu0
      %v822 = vadd.f32 0.0, %v821
      %v823 = vpop.f32.mrf.mxu0
      %v824 = vpop.f32.mrf.mxu0
      %v825 = vadd.f32 0.0, %v824
      %v826 = vpop.f32.mrf.mxu0
      %827 = vdwg.mxu0
      %828 = vrot.lane.b32.xlu0 %v577, 96
      %v829 = vpop.permute.xlu0 %828
      %v831 = vsel %vm584, %v577, 0
      %v834 = vsel %vm584, %v829, 0
      %836 = vmatprep.subr.bf16.mxu0 0
      %837 = vmatpush1.bf16.xpose.msra.mxu0 0
      %838 = vmatprep.subr.bf16.mxu0 0
      %839 = vmatpush1.bf16.xpose.msra.mxu0 0
      %840 = vmatprep.subr.bf16.mxu0 0
      %841 = vmatpush1.bf16.xpose.msra.mxu0 0
      %842 = vmatprep.subr.bf16.mxu0 0
      %843 = vmatpush1.bf16.xpose.msra.mxu0 0
      %844 = vmatprep.subr.bf16.mxu0 0
      %845 = vmatpush1.bf16.xpose.msra.mxu0 0
      %846 = vmatprep.subr.bf16.mxu0 0
      %847 = vmatpush1.bf16.xpose.msra.mxu0 0
      %848 = vmatprep.subr.bf16.mxu0 0
      %849 = vmatpush1.bf16.xpose.msra.mxu0 0
      %850 = vmatprep.subr.bf16.mxu0 0
      %851 = vmatpush1.bf16.xpose.msra.mxu0 %v834
      %852 = vmatprep.subr.bf16.mxu0 0
      %853 = vmatpush2.bf16.xpose.msra.mxu0 0
      %854 = vmatprep.subr.bf16.mxu0 0
      %855 = vmatpush2.bf16.xpose.msra.mxu0 0
      %856 = vmatprep.subr.bf16.mxu0 0
      %857 = vmatpush2.bf16.xpose.msra.mxu0 0
      %858 = vmatprep.subr.bf16.mxu0 0
      %859 = vmatpush2.bf16.xpose.msra.mxu0 0
      %860 = vmatprep.subr.bf16.mxu0 0
      %861 = vmatpush2.bf16.xpose.msra.mxu0 0
      %862 = vmatprep.subr.bf16.mxu0 0
      %863 = vmatpush2.bf16.xpose.msra.mxu0 0
      %864 = vmatprep.subr.bf16.mxu0 0
      %865 = vmatpush2.bf16.xpose.msra.mxu0 0
      %866 = vmatprep.subr.bf16.mxu0 0
      %867 = vmatpush2.bf16.xpose.msra.mxu0 0
      %868 = vmatprep.mubr.bf16.mxu0 0
      %869 = vmatmul.mubr.bf16.gmra.mxu0 %v831
      %v870 = vpop.f32.mrf.mxu0
      %v871 = vadd.f32 0.0, %v870
      %v872 = vpop.f32.mrf.mxu0
      %v873 = vpop.f32.mrf.mxu0
      %v874 = vadd.f32 0.0, %v873
      %v875 = vpop.f32.mrf.mxu0
      %876 = vdwg.mxu0
      %877 = vrot.lane.b32.xlu0 %v579, 96
      %v878 = vpop.permute.xlu0 %877
      %v880 = vsel %vm584, %v579, 0
      %v883 = vsel %vm584, %v878, 0
      %885 = vmatprep.subr.bf16.mxu0 0
      %886 = vmatpush1.bf16.xpose.msra.mxu0 0
      %887 = vmatprep.subr.bf16.mxu0 0
      %888 = vmatpush1.bf16.xpose.msra.mxu0 0
      %889 = vmatprep.subr.bf16.mxu0 0
      %890 = vmatpush1.bf16.xpose.msra.mxu0 0
      %891 = vmatprep.subr.bf16.mxu0 0
      %892 = vmatpush1.bf16.xpose.msra.mxu0 0
      %893 = vmatprep.subr.bf16.mxu0 0
      %894 = vmatpush1.bf16.xpose.msra.mxu0 0
      %895 = vmatprep.subr.bf16.mxu0 0
      %896 = vmatpush1.bf16.xpose.msra.mxu0 0
      %897 = vmatprep.subr.bf16.mxu0 0
      %898 = vmatpush1.bf16.xpose.msra.mxu0 0
      %899 = vmatprep.subr.bf16.mxu0 0
      %900 = vmatpush1.bf16.xpose.msra.mxu0 %v883
      %901 = vmatprep.subr.bf16.mxu0 0
      %902 = vmatpush2.bf16.xpose.msra.mxu0 0
      %903 = vmatprep.subr.bf16.mxu0 0
      %904 = vmatpush2.bf16.xpose.msra.mxu0 0
      %905 = vmatprep.subr.bf16.mxu0 0
      %906 = vmatpush2.bf16.xpose.msra.mxu0 0
      %907 = vmatprep.subr.bf16.mxu0 0
      %908 = vmatpush2.bf16.xpose.msra.mxu0 0
      %909 = vmatprep.subr.bf16.mxu0 0
      %910 = vmatpush2.bf16.xpose.msra.mxu0 0
      %911 = vmatprep.subr.bf16.mxu0 0
      %912 = vmatpush2.bf16.xpose.msra.mxu0 0
      %913 = vmatprep.subr.bf16.mxu0 0
      %914 = vmatpush2.bf16.xpose.msra.mxu0 0
      %915 = vmatprep.subr.bf16.mxu0 0
      %916 = vmatpush2.bf16.xpose.msra.mxu0 0
      %917 = vmatprep.mubr.bf16.mxu0 0
      %918 = vmatmul.mubr.bf16.gmra.mxu0 %v880
      %v919 = vpop.f32.mrf.mxu0
      %v920 = vadd.f32 0.0, %v919
      %v921 = vpop.f32.mrf.mxu0
      %v922 = vpop.f32.mrf.mxu0
      %v923 = vadd.f32 0.0, %v922
      %v924 = vpop.f32.mrf.mxu0
      %925 = vdwg.mxu0
      %926 = vrot.lane.b32.xlu0 %v581, 96
      %v927 = vpop.permute.xlu0 %926
      %v929 = vsel %vm584, %v581, 0
      %v932 = vsel %vm584, %v927, 0
      %934 = vmatprep.subr.bf16.mxu0 0
      %935 = vmatpush1.bf16.xpose.msra.mxu0 0
      %936 = vmatprep.subr.bf16.mxu0 0
      %937 = vmatpush1.bf16.xpose.msra.mxu0 0
      %938 = vmatprep.subr.bf16.mxu0 0
      %939 = vmatpush1.bf16.xpose.msra.mxu0 0
      %940 = vmatprep.subr.bf16.mxu0 0
      %941 = vmatpush1.bf16.xpose.msra.mxu0 0
      %942 = vmatprep.subr.bf16.mxu0 0
      %943 = vmatpush1.bf16.xpose.msra.mxu0 0
      %944 = vmatprep.subr.bf16.mxu0 0
      %945 = vmatpush1.bf16.xpose.msra.mxu0 0
      %946 = vmatprep.subr.bf16.mxu0 0
      %947 = vmatpush1.bf16.xpose.msra.mxu0 0
      %948 = vmatprep.subr.bf16.mxu0 0
      %949 = vmatpush1.bf16.xpose.msra.mxu0 %v932
      %950 = vmatprep.subr.bf16.mxu0 0
      %951 = vmatpush2.bf16.xpose.msra.mxu0 0
      %952 = vmatprep.subr.bf16.mxu0 0
      %953 = vmatpush2.bf16.xpose.msra.mxu0 0
      %954 = vmatprep.subr.bf16.mxu0 0
      %955 = vmatpush2.bf16.xpose.msra.mxu0 0
      %956 = vmatprep.subr.bf16.mxu0 0
      %957 = vmatpush2.bf16.xpose.msra.mxu0 0
      %958 = vmatprep.subr.bf16.mxu0 0
      %959 = vmatpush2.bf16.xpose.msra.mxu0 0
      %960 = vmatprep.subr.bf16.mxu0 0
      %961 = vmatpush2.bf16.xpose.msra.mxu0 0
      %962 = vmatprep.subr.bf16.mxu0 0
      %963 = vmatpush2.bf16.xpose.msra.mxu0 0
      %964 = vmatprep.subr.bf16.mxu0 0
      %965 = vmatpush2.bf16.xpose.msra.mxu0 0
      %966 = vmatprep.mubr.bf16.mxu0 0
      %967 = vmatmul.mubr.bf16.gmra.mxu0 %v929
      %v968 = vpop.f32.mrf.mxu0
      %v969 = vadd.f32 0.0, %v968
      %v970 = vpop.f32.mrf.mxu0
      %v971 = vpop.f32.mrf.mxu0
      %v972 = vadd.f32 0.0, %v971
      %v973 = vpop.f32.mrf.mxu0
      %974 = vdwg.mxu0
      %v975 = vld [vmem:[%s7] sm:$0xff]
      %v976 = vld [vmem:[%s7 + $0x8] sm:$0xff]
      %v977 = vld [vmem:[%s7 + $0x10] sm:$0xff]
      %v978 = vld [vmem:[%s7 + $0x18] sm:$0xff]
      %v979 = vadd.f32 %v626, %v975
      %v980 = vadd.f32 %v629, %v976
      %v981 = vadd.f32 %v675, %v975
      %v982 = vadd.f32 %v678, %v976
      %v983 = vadd.f32 %v724, %v975
      %v984 = vadd.f32 %v727, %v976
      %v985 = vadd.f32 %v773, %v975
      %v986 = vadd.f32 %v776, %v976
      %v987 = vadd.f32 %v822, %v977
      %v988 = vadd.f32 %v825, %v978
      %v989 = vadd.f32 %v871, %v977
      %v990 = vadd.f32 %v874, %v978
      %v991 = vadd.f32 %v920, %v977
      %v992 = vadd.f32 %v923, %v978
      %v993 = vadd.f32 %v969, %v977
      %v994 = vadd.f32 %v972, %v978
      %v995 = vsel %vm584, %v979, -inf
      %996 = vmax.xlane.f32.xlu0 %v995
      %v997 = vpop.xlane.xlu0 %996
      %v998 = vsel %vm584, %v980, -inf
      %999 = vmax.xlane.f32.xlu0 %v998
      %v1000 = vpop.xlane.xlu0 %999
      %v1001 = vsel %vm584, %v981, -inf
      %1002 = vmax.xlane.f32.xlu0 %v1001
      %v1003 = vpop.xlane.xlu0 %1002
      %v1004 = vsel %vm584, %v982, -inf
      %1005 = vmax.xlane.f32.xlu0 %v1004
      %v1006 = vpop.xlane.xlu0 %1005
      %v1007 = vsel %vm584, %v983, -inf
      %1008 = vmax.xlane.f32.xlu0 %v1007
      %v1009 = vpop.xlane.xlu0 %1008
      %v1010 = vsel %vm584, %v984, -inf
      %1011 = vmax.xlane.f32.xlu0 %v1010
      %v1012 = vpop.xlane.xlu0 %1011
      %v1013 = vsel %vm584, %v985, -inf
      %1014 = vmax.xlane.f32.xlu0 %v1013
      %v1015 = vpop.xlane.xlu0 %1014
      %v1016 = vsel %vm584, %v986, -inf
      %1017 = vmax.xlane.f32.xlu0 %v1016
      %v1018 = vpop.xlane.xlu0 %1017
      %v1019 = vsel %vm584, %v987, -inf
      %1020 = vmax.xlane.f32.xlu0 %v1019
      %v1021 = vpop.xlane.xlu0 %1020
      %v1022 = vsel %vm584, %v988, -inf
      %1023 = vmax.xlane.f32.xlu0 %v1022
      %v1024 = vpop.xlane.xlu0 %1023
      %v1025 = vsel %vm584, %v989, -inf
      %1026 = vmax.xlane.f32.xlu0 %v1025
      %v1027 = vpop.xlane.xlu0 %1026
      %v1028 = vsel %vm584, %v990, -inf
      %1029 = vmax.xlane.f32.xlu0 %v1028
      %v1030 = vpop.xlane.xlu0 %1029
      %v1031 = vsel %vm584, %v991, -inf
      %1032 = vmax.xlane.f32.xlu0 %v1031
      %v1033 = vpop.xlane.xlu0 %1032
      %v1034 = vsel %vm584, %v992, -inf
      %1035 = vmax.xlane.f32.xlu0 %v1034
      %v1036 = vpop.xlane.xlu0 %1035
      %v1037 = vsel %vm584, %v993, -inf
      %1038 = vmax.xlane.f32.xlu0 %v1037
      %v1039 = vpop.xlane.xlu0 %1038
      %v1040 = vsel %vm584, %v994, -inf
      %1041 = vmax.xlane.f32.xlu0 %v1040
      %v1042 = vpop.xlane.xlu0 %1041
      %v1043 = vsub.f32 %v979, %v997
      %v1044 = vsub.f32 %v980, %v1000
      %v1045 = vsub.f32 %v981, %v1003
      %v1046 = vsub.f32 %v982, %v1006
      %v1047 = vsub.f32 %v983, %v1009
      %v1048 = vsub.f32 %v984, %v1012
      %v1049 = vsub.f32 %v985, %v1015
      %v1050 = vsub.f32 %v986, %v1018
      %v1051 = vsub.f32 %v987, %v1021
      %v1052 = vsub.f32 %v988, %v1024
      %v1053 = vsub.f32 %v989, %v1027
      %v1054 = vsub.f32 %v990, %v1030
      %v1055 = vsub.f32 %v991, %v1033
      %v1056 = vsub.f32 %v992, %v1036
      %v1057 = vsub.f32 %v993, %v1039
      %v1058 = vsub.f32 %v994, %v1042
      %v1059 = vmul.f32 %v1043, 1.442695
      %v1060 = vpow.pop %v1059
      %v1061 = vmul.f32 %v1044, 1.442695
      %v1062 = vpow.pop %v1061
      %v1063 = vmul.f32 %v1045, 1.442695
      %v1064 = vpow.pop %v1063
      %v1065 = vmul.f32 %v1046, 1.442695
      %v1066 = vpow.pop %v1065
      %v1067 = vmul.f32 %v1047, 1.442695
      %v1068 = vpow.pop %v1067
      %v1069 = vmul.f32 %v1048, 1.442695
      %v1070 = vpow.pop %v1069
      %v1071 = vmul.f32 %v1049, 1.442695
      %v1072 = vpow.pop %v1071
      %v1073 = vmul.f32 %v1050, 1.442695
      %v1074 = vpow.pop %v1073
      %v1075 = vmul.f32 %v1051, 1.442695
      %v1076 = vpow.pop %v1075
      %v1077 = vmul.f32 %v1052, 1.442695
      %v1078 = vpow.pop %v1077
      %v1079 = vmul.f32 %v1053, 1.442695
      %v1080 = vpow.pop %v1079
      %v1081 = vmul.f32 %v1054, 1.442695
      %v1082 = vpow.pop %v1081
      %v1083 = vmul.f32 %v1055, 1.442695
      %v1084 = vpow.pop %v1083
      %v1085 = vmul.f32 %v1056, 1.442695
      %v1086 = vpow.pop %v1085
      %v1087 = vmul.f32 %v1057, 1.442695
      %v1088 = vpow.pop %v1087
      %v1089 = vmul.f32 %v1058, 1.442695
      %v1090 = vpow.pop %v1089
      %v1091 = vsel %vm584, %v1060, 0.0
      %1092 = vadd.xlane.f32.xlu0 %v1091
      %v1093 = vpop.xlane.xlu0 %1092
      %v1094 = vsel %vm584, %v1062, 0.0
      %1095 = vadd.xlane.f32.xlu0 %v1094
      %v1096 = vpop.xlane.xlu0 %1095
      %v1097 = vsel %vm584, %v1064, 0.0
      %1098 = vadd.xlane.f32.xlu0 %v1097
      %v1099 = vpop.xlane.xlu0 %1098
      %v1100 = vsel %vm584, %v1066, 0.0
      %1101 = vadd.xlane.f32.xlu0 %v1100
      %v1102 = vpop.xlane.xlu0 %1101
      %v1103 = vsel %vm584, %v1068, 0.0
      %1104 = vadd.xlane.f32.xlu0 %v1103
      %v1105 = vpop.xlane.xlu0 %1104
      %v1106 = vsel %vm584, %v1070, 0.0
      %1107 = vadd.xlane.f32.xlu0 %v1106
      %v1108 = vpop.xlane.xlu0 %1107
      %v1109 = vsel %vm584, %v1072, 0.0
      %1110 = vadd.xlane.f32.xlu0 %v1109
      %v1111 = vpop.xlane.xlu0 %1110
      %v1112 = vsel %vm584, %v1074, 0.0
      %1113 = vadd.xlane.f32.xlu0 %v1112
      %v1114 = vpop.xlane.xlu0 %1113
      %v1115 = vsel %vm584, %v1076, 0.0
      %1116 = vadd.xlane.f32.xlu0 %v1115
      %v1117 = vpop.xlane.xlu0 %1116
      %v1118 = vsel %vm584, %v1078, 0.0
      %1119 = vadd.xlane.f32.xlu0 %v1118
      %v1120 = vpop.xlane.xlu0 %1119
      %v1121 = vsel %vm584, %v1080, 0.0
      %1122 = vadd.xlane.f32.xlu0 %v1121
      %v1123 = vpop.xlane.xlu0 %1122
      %v1124 = vsel %vm584, %v1082, 0.0
      %1125 = vadd.xlane.f32.xlu0 %v1124
      %v1126 = vpop.xlane.xlu0 %1125
      %v1127 = vsel %vm584, %v1084, 0.0
      %1128 = vadd.xlane.f32.xlu0 %v1127
      %v1129 = vpop.xlane.xlu0 %1128
      %v1130 = vsel %vm584, %v1086, 0.0
      %1131 = vadd.xlane.f32.xlu0 %v1130
      %v1132 = vpop.xlane.xlu0 %1131
      %v1133 = vsel %vm584, %v1088, 0.0
      %1134 = vadd.xlane.f32.xlu0 %v1133
      %v1135 = vpop.xlane.xlu0 %1134
      %v1136 = vsel %vm584, %v1090, 0.0
      %1137 = vadd.xlane.f32.xlu0 %v1136
      %v1138 = vpop.xlane.xlu0 %1137
      %v1139 = vrcp.pop %v1093
      %v1140 = vrcp.pop %v1096
      %v1141 = vrcp.pop %v1099
      %v1142 = vrcp.pop %v1102
      %v1143 = vrcp.pop %v1105
      %v1144 = vrcp.pop %v1108
      %v1145 = vrcp.pop %v1111
      %v1146 = vrcp.pop %v1114
      %v1147 = vrcp.pop %v1117
      %v1148 = vrcp.pop %v1120
      %v1149 = vrcp.pop %v1123
      %v1150 = vrcp.pop %v1126
      %v1151 = vrcp.pop %v1129
      %v1152 = vrcp.pop %v1132
      %v1153 = vrcp.pop %v1135
      %v1154 = vrcp.pop %v1138
      %v1155 = vmul.f32 %v1060, %v1139
      %v1156 = vmul.f32 %v1062, %v1140
      %v1157 = vmul.f32 %v1064, %v1141
      %v1158 = vmul.f32 %v1066, %v1142
      %v1159 = vmul.f32 %v1068, %v1143
      %v1160 = vmul.f32 %v1070, %v1144
      %v1161 = vmul.f32 %v1072, %v1145
      %v1162 = vmul.f32 %v1074, %v1146
      %v1163 = vmul.f32 %v1076, %v1147
      %v1164 = vmul.f32 %v1078, %v1148
      %v1165 = vmul.f32 %v1080, %v1149
      %v1166 = vmul.f32 %v1082, %v1150
      %v1167 = vmul.f32 %v1084, %v1151
      %v1168 = vmul.f32 %v1086, %v1152
      %v1169 = vmul.f32 %v1088, %v1153
      %v1170 = vmul.f32 %v1090, %v1154
      %v1171 = vpack.c.bf16 %v1156, %v1155
      %v1172 = vpack.c.bf16 %v1158, %v1157
      %v1173 = vpack.c.bf16 %v1160, %v1159
      %v1174 = vpack.c.bf16 %v1162, %v1161
      %v1175 = vpack.c.bf16 %v1164, %v1163
      %v1176 = vpack.c.bf16 %v1166, %v1165
      %v1177 = vpack.c.bf16 %v1168, %v1167
      %v1178 = vpack.c.bf16 %v1170, %v1169
      %1179 = vrot.lane.b32.xlu0 %v566, 64
      %v1180 = vpop.permute.xlu0 %1179
      %v1183 = vsel %vm584, %v1171, 0
      %1185 = vmatprep.subr.bf16.mxu0 0
      %1186 = vmatpush1.bf16.msra.mxu0 0
      %1187 = vmatprep.subr.bf16.mxu0 0
      %1188 = vmatpush1.bf16.msra.mxu0 0
      %1189 = vmatprep.subr.bf16.mxu0 0
      %1190 = vmatpush1.bf16.msra.mxu0 0
      %1191 = vmatprep.subr.bf16.mxu0 0
      %1192 = vmatpush1.bf16.msra.mxu0 0
      %1193 = vmatprep.subr.bf16.mxu0 0
      %1194 = vmatpush1.bf16.msra.mxu0 0
      %1195 = vmatprep.subr.bf16.mxu0 0
      %1196 = vmatpush1.bf16.msra.mxu0 0
      %1197 = vmatprep.subr.bf16.mxu0 0
      %1198 = vmatpush1.bf16.msra.mxu0 0
      %1199 = vmatprep.subr.bf16.mxu0 0
      %1200 = vmatpush1.bf16.msra.mxu0 %v1180
      %1201 = vmatprep.subr.bf16.mxu0 0
      %1202 = vmatpush2.bf16.msra.mxu0 0
      %1203 = vmatprep.subr.bf16.mxu0 0
      %1204 = vmatpush2.bf16.msra.mxu0 0
      %1205 = vmatprep.subr.bf16.mxu0 0
      %1206 = vmatpush2.bf16.msra.mxu0 0
      %1207 = vmatprep.subr.bf16.mxu0 0
      %1208 = vmatpush2.bf16.msra.mxu0 0
      %1209 = vmatprep.subr.bf16.mxu0 0
      %1210 = vmatpush2.bf16.msra.mxu0 0
      %1211 = vmatprep.subr.bf16.mxu0 0
      %1212 = vmatpush2.bf16.msra.mxu0 0
      %1213 = vmatprep.subr.bf16.mxu0 0
      %1214 = vmatpush2.bf16.msra.mxu0 0
      %1215 = vmatprep.subr.bf16.mxu0 0
      %1216 = vmatpush2.bf16.msra.mxu0 0
      %1217 = vmatprep.mubr.bf16.mxu0 0
      %1218 = vmatmul.mubr.bf16.gmra.mxu0 %v1183
      %v1219 = vpop.f32.mrf.mxu0
      %v1220 = vadd.f32 0.0, %v1219
      %v1221 = vpop.f32.mrf.mxu0
      %v1222 = vpop.f32.mrf.mxu0
      %v1223 = vadd.f32 0.0, %v1222
      %v1224 = vpop.f32.mrf.mxu0
      %1225 = vdwg.mxu0
      %1226 = vrot.lane.b32.xlu0 %v567, 64
      %v1227 = vpop.permute.xlu0 %1226
      %v1230 = vsel %vm584, %v1172, 0
      %1232 = vmatprep.subr.bf16.mxu0 0
      %1233 = vmatpush1.bf16.msra.mxu0 0
      %1234 = vmatprep.subr.bf16.mxu0 0
      %1235 = vmatpush1.bf16.msra.mxu0 0
      %1236 = vmatprep.subr.bf16.mxu0 0
      %1237 = vmatpush1.bf16.msra.mxu0 0
      %1238 = vmatprep.subr.bf16.mxu0 0
      %1239 = vmatpush1.bf16.msra.mxu0 0
      %1240 = vmatprep.subr.bf16.mxu0 0
      %1241 = vmatpush1.bf16.msra.mxu0 0
      %1242 = vmatprep.subr.bf16.mxu0 0
      %1243 = vmatpush1.bf16.msra.mxu0 0
      %1244 = vmatprep.subr.bf16.mxu0 0
      %1245 = vmatpush1.bf16.msra.mxu0 0
      %1246 = vmatprep.subr.bf16.mxu0 0
      %1247 = vmatpush1.bf16.msra.mxu0 %v1227
      %1248 = vmatprep.subr.bf16.mxu0 0
      %1249 = vmatpush2.bf16.msra.mxu0 0
      %1250 = vmatprep.subr.bf16.mxu0 0
      %1251 = vmatpush2.bf16.msra.mxu0 0
      %1252 = vmatprep.subr.bf16.mxu0 0
      %1253 = vmatpush2.bf16.msra.mxu0 0
      %1254 = vmatprep.subr.bf16.mxu0 0
      %1255 = vmatpush2.bf16.msra.mxu0 0
      %1256 = vmatprep.subr.bf16.mxu0 0
      %1257 = vmatpush2.bf16.msra.mxu0 0
      %1258 = vmatprep.subr.bf16.mxu0 0
      %1259 = vmatpush2.bf16.msra.mxu0 0
      %1260 = vmatprep.subr.bf16.mxu0 0
      %1261 = vmatpush2.bf16.msra.mxu0 0
      %1262 = vmatprep.subr.bf16.mxu0 0
      %1263 = vmatpush2.bf16.msra.mxu0 0
      %1264 = vmatprep.mubr.bf16.mxu0 0
      %1265 = vmatmul.mubr.bf16.gmra.mxu0 %v1230
      %v1266 = vpop.f32.mrf.mxu0
      %v1267 = vadd.f32 0.0, %v1266
      %v1268 = vpop.f32.mrf.mxu0
      %v1269 = vpop.f32.mrf.mxu0
      %v1270 = vadd.f32 0.0, %v1269
      %v1271 = vpop.f32.mrf.mxu0
      %1272 = vdwg.mxu0
      %1273 = vrot.lane.b32.xlu0 %v568, 64
      %v1274 = vpop.permute.xlu0 %1273
      %v1277 = vsel %vm584, %v1173, 0
      %1279 = vmatprep.subr.bf16.mxu0 0
      %1280 = vmatpush1.bf16.msra.mxu0 0
      %1281 = vmatprep.subr.bf16.mxu0 0
      %1282 = vmatpush1.bf16.msra.mxu0 0
      %1283 = vmatprep.subr.bf16.mxu0 0
      %1284 = vmatpush1.bf16.msra.mxu0 0
      %1285 = vmatprep.subr.bf16.mxu0 0
      %1286 = vmatpush1.bf16.msra.mxu0 0
      %1287 = vmatprep.subr.bf16.mxu0 0
      %1288 = vmatpush1.bf16.msra.mxu0 0
      %1289 = vmatprep.subr.bf16.mxu0 0
      %1290 = vmatpush1.bf16.msra.mxu0 0
      %1291 = vmatprep.subr.bf16.mxu0 0
      %1292 = vmatpush1.bf16.msra.mxu0 0
      %1293 = vmatprep.subr.bf16.mxu0 0
      %1294 = vmatpush1.bf16.msra.mxu0 %v1274
      %1295 = vmatprep.subr.bf16.mxu0 0
      %1296 = vmatpush2.bf16.msra.mxu0 0
      %1297 = vmatprep.subr.bf16.mxu0 0
      %1298 = vmatpush2.bf16.msra.mxu0 0
      %1299 = vmatprep.subr.bf16.mxu0 0
      %1300 = vmatpush2.bf16.msra.mxu0 0
      %1301 = vmatprep.subr.bf16.mxu0 0
      %1302 = vmatpush2.bf16.msra.mxu0 0
      %1303 = vmatprep.subr.bf16.mxu0 0
      %1304 = vmatpush2.bf16.msra.mxu0 0
      %1305 = vmatprep.subr.bf16.mxu0 0
      %1306 = vmatpush2.bf16.msra.mxu0 0
      %1307 = vmatprep.subr.bf16.mxu0 0
      %1308 = vmatpush2.bf16.msra.mxu0 0
      %1309 = vmatprep.subr.bf16.mxu0 0
      %1310 = vmatpush2.bf16.msra.mxu0 0
      %1311 = vmatprep.mubr.bf16.mxu0 0
      %1312 = vmatmul.mubr.bf16.gmra.mxu0 %v1277
      %v1313 = vpop.f32.mrf.mxu0
      %v1314 = vadd.f32 0.0, %v1313
      %v1315 = vpop.f32.mrf.mxu0
      %v1316 = vpop.f32.mrf.mxu0
      %v1317 = vadd.f32 0.0, %v1316
      %v1318 = vpop.f32.mrf.mxu0
      %1319 = vdwg.mxu0
      %1320 = vrot.lane.b32.xlu0 %v569, 64
      %v1321 = vpop.permute.xlu0 %1320
      %v1324 = vsel %vm584, %v1174, 0
      %1326 = vmatprep.subr.bf16.mxu0 0
      %1327 = vmatpush1.bf16.msra.mxu0 0
      %1328 = vmatprep.subr.bf16.mxu0 0
      %1329 = vmatpush1.bf16.msra.mxu0 0
      %1330 = vmatprep.subr.bf16.mxu0 0
      %1331 = vmatpush1.bf16.msra.mxu0 0
      %1332 = vmatprep.subr.bf16.mxu0 0
      %1333 = vmatpush1.bf16.msra.mxu0 0
      %1334 = vmatprep.subr.bf16.mxu0 0
      %1335 = vmatpush1.bf16.msra.mxu0 0
      %1336 = vmatprep.subr.bf16.mxu0 0
      %1337 = vmatpush1.bf16.msra.mxu0 0
      %1338 = vmatprep.subr.bf16.mxu0 0
      %1339 = vmatpush1.bf16.msra.mxu0 0
      %1340 = vmatprep.subr.bf16.mxu0 0
      %1341 = vmatpush1.bf16.msra.mxu0 %v1321
      %1342 = vmatprep.subr.bf16.mxu0 0
      %1343 = vmatpush2.bf16.msra.mxu0 0
      %1344 = vmatprep.subr.bf16.mxu0 0
      %1345 = vmatpush2.bf16.msra.mxu0 0
      %1346 = vmatprep.subr.bf16.mxu0 0
      %1347 = vmatpush2.bf16.msra.mxu0 0
      %1348 = vmatprep.subr.bf16.mxu0 0
      %1349 = vmatpush2.bf16.msra.mxu0 0
      %1350 = vmatprep.subr.bf16.mxu0 0
      %1351 = vmatpush2.bf16.msra.mxu0 0
      %1352 = vmatprep.subr.bf16.mxu0 0
      %1353 = vmatpush2.bf16.msra.mxu0 0
      %1354 = vmatprep.subr.bf16.mxu0 0
      %1355 = vmatpush2.bf16.msra.mxu0 0
      %1356 = vmatprep.subr.bf16.mxu0 0
      %1357 = vmatpush2.bf16.msra.mxu0 0
      %1358 = vmatprep.mubr.bf16.mxu0 0
      %1359 = vmatmul.mubr.bf16.gmra.mxu0 %v1324
      %v1360 = vpop.f32.mrf.mxu0
      %v1361 = vadd.f32 0.0, %v1360
      %v1362 = vpop.f32.mrf.mxu0
      %v1363 = vpop.f32.mrf.mxu0
      %v1364 = vadd.f32 0.0, %v1363
      %v1365 = vpop.f32.mrf.mxu0
      %1366 = vdwg.mxu0
      %1367 = vrot.lane.b32.xlu0 %v575, 64
      %v1368 = vpop.permute.xlu0 %1367
      %v1371 = vsel %vm584, %v1175, 0
      %1373 = vmatprep.subr.bf16.mxu0 0
      %1374 = vmatpush1.bf16.msra.mxu0 0
      %1375 = vmatprep.subr.bf16.mxu0 0
      %1376 = vmatpush1.bf16.msra.mxu0 0
      %1377 = vmatprep.subr.bf16.mxu0 0
      %1378 = vmatpush1.bf16.msra.mxu0 0
      %1379 = vmatprep.subr.bf16.mxu0 0
      %1380 = vmatpush1.bf16.msra.mxu0 0
      %1381 = vmatprep.subr.bf16.mxu0 0
      %1382 = vmatpush1.bf16.msra.mxu0 0
      %1383 = vmatprep.subr.bf16.mxu0 0
      %1384 = vmatpush1.bf16.msra.mxu0 0
      %1385 = vmatprep.subr.bf16.mxu0 0
      %1386 = vmatpush1.bf16.msra.mxu0 0
      %1387 = vmatprep.subr.bf16.mxu0 0
      %1388 = vmatpush1.bf16.msra.mxu0 %v1368
      %1389 = vmatprep.subr.bf16.mxu0 0
      %1390 = vmatpush2.bf16.msra.mxu0 0
      %1391 = vmatprep.subr.bf16.mxu0 0
      %1392 = vmatpush2.bf16.msra.mxu0 0
      %1393 = vmatprep.subr.bf16.mxu0 0
      %1394 = vmatpush2.bf16.msra.mxu0 0
      %1395 = vmatprep.subr.bf16.mxu0 0
      %1396 = vmatpush2.bf16.msra.mxu0 0
      %1397 = vmatprep.subr.bf16.mxu0 0
      %1398 = vmatpush2.bf16.msra.mxu0 0
      %1399 = vmatprep.subr.bf16.mxu0 0
      %1400 = vmatpush2.bf16.msra.mxu0 0
      %1401 = vmatprep.subr.bf16.mxu0 0
      %1402 = vmatpush2.bf16.msra.mxu0 0
      %1403 = vmatprep.subr.bf16.mxu0 0
      %1404 = vmatpush2.bf16.msra.mxu0 0
      %1405 = vmatprep.mubr.bf16.mxu0 0
      %1406 = vmatmul.mubr.bf16.gmra.mxu0 %v1371
      %v1407 = vpop.f32.mrf.mxu0
      %v1408 = vadd.f32 0.0, %v1407
      %v1409 = vpop.f32.mrf.mxu0
      %v1410 = vpop.f32.mrf.mxu0
      %v1411 = vadd.f32 0.0, %v1410
      %v1412 = vpop.f32.mrf.mxu0
      %1413 = vdwg.mxu0
      %1414 = vrot.lane.b32.xlu0 %v577, 64
      %v1415 = vpop.permute.xlu0 %1414
      %v1418 = vsel %vm584, %v1176, 0
      %1420 = vmatprep.subr.bf16.mxu0 0
      %1421 = vmatpush1.bf16.msra.mxu0 0
      %1422 = vmatprep.subr.bf16.mxu0 0
      %1423 = vmatpush1.bf16.msra.mxu0 0
      %1424 = vmatprep.subr.bf16.mxu0 0
      %1425 = vmatpush1.bf16.msra.mxu0 0
      %1426 = vmatprep.subr.bf16.mxu0 0
      %1427 = vmatpush1.bf16.msra.mxu0 0
      %1428 = vmatprep.subr.bf16.mxu0 0
      %1429 = vmatpush1.bf16.msra.mxu0 0
      %1430 = vmatprep.subr.bf16.mxu0 0
      %1431 = vmatpush1.bf16.msra.mxu0 0
      %1432 = vmatprep.subr.bf16.mxu0 0
      %1433 = vmatpush1.bf16.msra.mxu0 0
      %1434 = vmatprep.subr.bf16.mxu0 0
      %1435 = vmatpush1.bf16.msra.mxu0 %v1415
      %1436 = vmatprep.subr.bf16.mxu0 0
      %1437 = vmatpush2.bf16.msra.mxu0 0
      %1438 = vmatprep.subr.bf16.mxu0 0
      %1439 = vmatpush2.bf16.msra.mxu0 0
      %1440 = vmatprep.subr.bf16.mxu0 0
      %1441 = vmatpush2.bf16.msra.mxu0 0
      %1442 = vmatprep.subr.bf16.mxu0 0
      %1443 = vmatpush2.bf16.msra.mxu0 0
      %1444 = vmatprep.subr.bf16.mxu0 0
      %1445 = vmatpush2.bf16.msra.mxu0 0
      %1446 = vmatprep.subr.bf16.mxu0 0
      %1447 = vmatpush2.bf16.msra.mxu0 0
      %1448 = vmatprep.subr.bf16.mxu0 0
      %1449 = vmatpush2.bf16.msra.mxu0 0
      %1450 = vmatprep.subr.bf16.mxu0 0
      %1451 = vmatpush2.bf16.msra.mxu0 0
      %1452 = vmatprep.mubr.bf16.mxu0 0
      %1453 = vmatmul.mubr.bf16.gmra.mxu0 %v1418
      %v1454 = vpop.f32.mrf.mxu0
      %v1455 = vadd.f32 0.0, %v1454
      %v1456 = vpop.f32.mrf.mxu0
      %v1457 = vpop.f32.mrf.mxu0
      %v1458 = vadd.f32 0.0, %v1457
      %v1459 = vpop.f32.mrf.mxu0
      %1460 = vdwg.mxu0
      %1461 = vrot.lane.b32.xlu0 %v579, 64
      %v1462 = vpop.permute.xlu0 %1461
      %v1465 = vsel %vm584, %v1177, 0
      %1467 = vmatprep.subr.bf16.mxu0 0
      %1468 = vmatpush1.bf16.msra.mxu0 0
      %1469 = vmatprep.subr.bf16.mxu0 0
      %1470 = vmatpush1.bf16.msra.mxu0 0
      %1471 = vmatprep.subr.bf16.mxu0 0
      %1472 = vmatpush1.bf16.msra.mxu0 0
      %1473 = vmatprep.subr.bf16.mxu0 0
      %1474 = vmatpush1.bf16.msra.mxu0 0
      %1475 = vmatprep.subr.bf16.mxu0 0
      %1476 = vmatpush1.bf16.msra.mxu0 0
      %1477 = vmatprep.subr.bf16.mxu0 0
      %1478 = vmatpush1.bf16.msra.mxu0 0
      %1479 = vmatprep.subr.bf16.mxu0 0
      %1480 = vmatpush1.bf16.msra.mxu0 0
      %1481 = vmatprep.subr.bf16.mxu0 0
      %1482 = vmatpush1.bf16.msra.mxu0 %v1462
      %1483 = vmatprep.subr.bf16.mxu0 0
      %1484 = vmatpush2.bf16.msra.mxu0 0
      %1485 = vmatprep.subr.bf16.mxu0 0
      %1486 = vmatpush2.bf16.msra.mxu0 0
      %1487 = vmatprep.subr.bf16.mxu0 0
      %1488 = vmatpush2.bf16.msra.mxu0 0
      %1489 = vmatprep.subr.bf16.mxu0 0
      %1490 = vmatpush2.bf16.msra.mxu0 0
      %1491 = vmatprep.subr.bf16.mxu0 0
      %1492 = vmatpush2.bf16.msra.mxu0 0
      %1493 = vmatprep.subr.bf16.mxu0 0
      %1494 = vmatpush2.bf16.msra.mxu0 0
      %1495 = vmatprep.subr.bf16.mxu0 0
      %1496 = vmatpush2.bf16.msra.mxu0 0
      %1497 = vmatprep.subr.bf16.mxu0 0
      %1498 = vmatpush2.bf16.msra.mxu0 0
      %1499 = vmatprep.mubr.bf16.mxu0 0
      %1500 = vmatmul.mubr.bf16.gmra.mxu0 %v1465
      %v1501 = vpop.f32.mrf.mxu0
      %v1502 = vadd.f32 0.0, %v1501
      %v1503 = vpop.f32.mrf.mxu0
      %v1504 = vpop.f32.mrf.mxu0
      %v1505 = vadd.f32 0.0, %v1504
      %v1506 = vpop.f32.mrf.mxu0
      %1507 = vdwg.mxu0
      %1508 = vrot.lane.b32.xlu0 %v581, 64
      %v1509 = vpop.permute.xlu0 %1508
      %v1512 = vsel %vm584, %v1178, 0
      %1514 = vmatprep.subr.bf16.mxu0 0
      %1515 = vmatpush1.bf16.msra.mxu0 0
      %1516 = vmatprep.subr.bf16.mxu0 0
      %1517 = vmatpush1.bf16.msra.mxu0 0
      %1518 = vmatprep.subr.bf16.mxu0 0
      %1519 = vmatpush1.bf16.msra.mxu0 0
      %1520 = vmatprep.subr.bf16.mxu0 0
      %1521 = vmatpush1.bf16.msra.mxu0 0
      %1522 = vmatprep.subr.bf16.mxu0 0
      %1523 = vmatpush1.bf16.msra.mxu0 0
      %1524 = vmatprep.subr.bf16.mxu0 0
      %1525 = vmatpush1.bf16.msra.mxu0 0
      %1526 = vmatprep.subr.bf16.mxu0 0
      %1527 = vmatpush1.bf16.msra.mxu0 0
      %1528 = vmatprep.subr.bf16.mxu0 0
      %1529 = vmatpush1.bf16.msra.mxu0 %v1509
      %1530 = vmatprep.subr.bf16.mxu0 0
      %1531 = vmatpush2.bf16.msra.mxu0 0
      %1532 = vmatprep.subr.bf16.mxu0 0
      %1533 = vmatpush2.bf16.msra.mxu0 0
      %1534 = vmatprep.subr.bf16.mxu0 0
      %1535 = vmatpush2.bf16.msra.mxu0 0
      %1536 = vmatprep.subr.bf16.mxu0 0
      %1537 = vmatpush2.bf16.msra.mxu0 0
      %1538 = vmatprep.subr.bf16.mxu0 0
      %1539 = vmatpush2.bf16.msra.mxu0 0
      %1540 = vmatprep.subr.bf16.mxu0 0
      %1541 = vmatpush2.bf16.msra.mxu0 0
      %1542 = vmatprep.subr.bf16.mxu0 0
      %1543 = vmatpush2.bf16.msra.mxu0 0
      %1544 = vmatprep.subr.bf16.mxu0 0
      %1545 = vmatpush2.bf16.msra.mxu0 0
      %1546 = vmatprep.mubr.bf16.mxu0 0
      %1547 = vmatmul.mubr.bf16.gmra.mxu0 %v1512
      %v1548 = vpop.f32.mrf.mxu0
      %v1549 = vadd.f32 0.0, %v1548
      %v1550 = vpop.f32.mrf.mxu0
      %v1551 = vpop.f32.mrf.mxu0
      %v1552 = vadd.f32 0.0, %v1551
      %v1553 = vpop.f32.mrf.mxu0
      %1554 = vdwg.mxu0
      %v1555 = vpack.c.bf16 %v1223, %v1220
      %v1556 = vpack.c.bf16 %v1270, %v1267
      %v1557 = vpack.c.bf16 %v1317, %v1314
      %v1558 = vpack.c.bf16 %v1364, %v1361
      %v1559 = vpack.c.bf16 %v1411, %v1408
      %v1560 = vpack.c.bf16 %v1458, %v1455
      %v1561 = vpack.c.bf16 %v1505, %v1502
      %v1562 = vpack.c.bf16 %v1552, %v1549
      %1567 = vrot.lane.b32.xlu0 %v1559, 16
      %v1568 = vpop.permute.xlu0 %1567
      %1569 = vrot.lane.b32.xlu0 %v1560, 16
      %v1570 = vpop.permute.xlu0 %1569
      %1571 = vrot.lane.b32.xlu0 %v1561, 16
      %v1572 = vpop.permute.xlu0 %1571
      %1573 = vrot.lane.b32.xlu0 %v1562, 16
      %v1574 = vpop.permute.xlu0 %1573
      %v1577 = vsel %vm584, %v1555, %v1568
      %v1580 = vsel %vm584, %v1556, %v1570
      %v1583 = vsel %vm584, %v1557, %v1572
      %v1586 = vsel %vm584, %v1558, %v1574
      %v1587 = vld [vmem:[%s5] sm:$0xf]
      %v1588 = vld [vmem:[%s5 + $0x4] sm:$0xf]
      %v1589 = vld [vmem:[%s5 + $0x8] sm:$0xf]
      %v1590 = vld [vmem:[%s5 + $0xc] sm:$0xf]
      %v1591 = vld [vmem:[%s6] sm:$0x1]
      %v1593 = vlaneseq
      %v1594 = vshrl.u32 %v1593, 7
      %v1595 = vsub.s32 0, %v1594
      %v1596 = vrot.slane %v1591, %v1595
      %v1602 = vunpack.c.l.b16 %v1587
      %v1603 = vunpack.c.l.b16 %v1588
      %v1604 = vunpack.c.l.b16 %v1589
      %v1605 = vunpack.c.l.b16 %v1590
      %v1606 = vpack.c.b16 %v1603, %v1602
      %v1607 = vpack.c.b16 %v1605, %v1604
      %v1610 = vsel %vm326, %v1577, 0
      %v1612 = vsel %vm326, %v1580, 0
      %v1614 = vsel %vm326, %v1583, 0
      %v1616 = vsel %vm326, %v1586, 0
      %1618 = vmatprep.subr.bf16.mxu0 0
      %1619 = vmatpush1.bf16.msra.mxu0 0
      %1620 = vmatprep.subr.bf16.mxu0 0
      %1621 = vmatpush1.bf16.msra.mxu0 0
      %1622 = vmatprep.subr.bf16.mxu0 0
      %1623 = vmatpush1.bf16.msra.mxu0 0
      %1624 = vmatprep.subr.bf16.mxu0 0
      %1625 = vmatpush1.bf16.msra.mxu0 0
      %1626 = vmatprep.subr.bf16.mxu0 0
      %1627 = vmatpush1.bf16.msra.mxu0 0
      %1628 = vmatprep.subr.bf16.mxu0 0
      %1629 = vmatpush1.bf16.msra.mxu0 0
      %1630 = vmatprep.subr.bf16.mxu0 0
      %1631 = vmatpush1.bf16.msra.mxu0 %v1607
      %1632 = vmatprep.subr.bf16.mxu0 0
      %1633 = vmatpush1.bf16.msra.mxu0 %v1606
      %1634 = vmatprep.subr.bf16.mxu0 0
      %1635 = vmatpush2.bf16.msra.mxu0 0
      %1636 = vmatprep.subr.bf16.mxu0 0
      %1637 = vmatpush2.bf16.msra.mxu0 0
      %1638 = vmatprep.subr.bf16.mxu0 0
      %1639 = vmatpush2.bf16.msra.mxu0 0
      %1640 = vmatprep.subr.bf16.mxu0 0
      %1641 = vmatpush2.bf16.msra.mxu0 0
      %1642 = vmatprep.subr.bf16.mxu0 0
      %1643 = vmatpush2.bf16.msra.mxu0 0
      %1644 = vmatprep.subr.bf16.mxu0 0
      %1645 = vmatpush2.bf16.msra.mxu0 0
      %1646 = vmatprep.subr.bf16.mxu0 0
      %1647 = vmatpush2.bf16.msra.mxu0 0
      %1648 = vmatprep.subr.bf16.mxu0 0
      %1649 = vmatpush2.bf16.msra.mxu0 0
      %1650 = vmatprep.mubr.bf16.mxu0 0
      %1651 = vmatmul.mubr.bf16.gmra.mxu0 %v1610
      %v1652 = vpop.f32.mrf.mxu0
      %v1653 = vadd.f32 %v1596, %v1652
      %v1654 = vpop.f32.mrf.mxu0
      %v1655 = vpop.f32.mrf.mxu0
      %v1656 = vadd.f32 %v1596, %v1655
      %v1657 = vpop.f32.mrf.mxu0
      %1658 = vmatprep.mubr.bf16.mxu0 0
      %1659 = vmatmul.mubr.bf16.gmra.mxu0 %v1612
      %v1660 = vpop.f32.mrf.mxu0
      %v1661 = vadd.f32 %v1596, %v1660
      %v1662 = vpop.f32.mrf.mxu0
      %v1663 = vpop.f32.mrf.mxu0
      %v1664 = vadd.f32 %v1596, %v1663
      %v1665 = vpop.f32.mrf.mxu0
      %1666 = vmatprep.mubr.bf16.mxu0 0
      %1667 = vmatmul.mubr.bf16.gmra.mxu0 %v1614
      %v1668 = vpop.f32.mrf.mxu0
      %v1669 = vadd.f32 %v1596, %v1668
      %v1670 = vpop.f32.mrf.mxu0
      %v1671 = vpop.f32.mrf.mxu0
      %v1672 = vadd.f32 %v1596, %v1671
      %v1673 = vpop.f32.mrf.mxu0
      %1674 = vmatprep.mubr.bf16.mxu0 0
      %1675 = vmatmul.mubr.bf16.gmra.mxu0 %v1616
      %v1676 = vpop.f32.mrf.mxu0
      %v1677 = vadd.f32 %v1596, %v1676
      %v1678 = vpop.f32.mrf.mxu0
      %v1679 = vpop.f32.mrf.mxu0
      %v1680 = vadd.f32 %v1596, %v1679
      %v1681 = vpop.f32.mrf.mxu0
      %1682 = vdwg.mxu0
      %v1683 = vpack.c.bf16 %v1656, %v1653
      %v1684 = vpack.c.bf16 %v1664, %v1661
      %v1685 = vpack.c.bf16 %v1672, %v1669
      %v1686 = vpack.c.bf16 %v1680, %v1677
      %v1691 = vunpack.c.l.b16 %v1683
      %v1692 = vunpack.c.h.b16 %v1683
      %v1693 = vunpack.c.l.b16 %v1684
      %v1694 = vunpack.c.h.b16 %v1684
      %v1695 = vunpack.c.l.b16 %v1685
      %v1696 = vunpack.c.h.b16 %v1685
      %v1697 = vunpack.c.l.b16 %v1686
      %v1698 = vunpack.c.h.b16 %v1686
      %v1699 = vpack.c.b16 %v1691, %v1691
      %v1700 = vpack.c.b16 %v1692, %v1692
      %v1701 = vpack.c.b16 %v1693, %v1693
      %v1702 = vpack.c.b16 %v1694, %v1694
      %v1703 = vpack.c.b16 %v1695, %v1695
      %v1704 = vpack.c.b16 %v1696, %v1696
      %v1705 = vpack.c.b16 %v1697, %v1697
      %v1706 = vpack.c.b16 %v1698, %v1698
      %vm1715 = vcmask 257024
      %1716 = vst.msk [vmem:[%s307] sm:$0xf] %vm1715, %v1699
      %1717 = vst.msk [vmem:[%s307 + $0x4] sm:$0xf] %vm1715, %v1700
      %1718 = vst.msk [vmem:[%s307 + $0x8] sm:$0xf] %vm1715, %v1701
      %1719 = vst.msk [vmem:[%s307 + $0xc] sm:$0xf] %vm1715, %v1702
      %1720 = vst.msk [vmem:[%s307 + $0x10] sm:$0xf] %vm1715, %v1703
      %1721 = vst.msk [vmem:[%s307 + $0x14] sm:$0xf] %vm1715, %v1704
      %1722 = vst.msk [vmem:[%s307 + $0x18] sm:$0xf] %vm1715, %v1705
      %1723 = vst.msk [vmem:[%s307 + $0x1c] sm:$0xf] %vm1715, %v1706
      %s1724 = smul.u32 8, %s19
      %p1725 = scmp.lt.s32.totalorder %s1724, 15
      %s1726 = scalar_select %p1725, %s1724, 15
      %s1727 = smul.addr %s1726, 4
      %s1728 = scalar_lea.vmem %s8, %s1727
      // Predicated region
      $region53: #{stage_forward.4} parent=51 // pred_check
        %p1729 = pneg %p210
      $region54: #{stage_forward.4} parent=51 // pred_check_branch
        %1731 = sbr.rel (%p1729) target = $region56
      $region55: #{stage_forward.4} parent=51 // pred_region
        %s1732 = smul.u32 8, %s19
      $region56: #{stage_forward.4} parent=51 // pred_fallthru
        _
    $region52: #{stage_forward.4} parent=5 // pred_fallthru
      _
    %p1733 = scmp.le.s32.totalorder 2, %s14
    // Predicated region
    $region57: #{stage_forward.4} parent=5 // pred_check
      %p1734 = pneg %p1733
    $region58: #{stage_forward.4} parent=5 // pred_check_branch
      %1736 = sbr.rel (%p1734) target = $region60
    $region59: #{stage_forward.4} parent=5 // pred_region
      %s1737 = ssub.s32 %s14, 2
      // Predicated region
      $region61: #{stage_forward.4} parent=59 // pred_check
        %p1738 = pneg %p216
      $region62: #{stage_forward.4} parent=59 // pred_check_branch
        %1740 = sbr.rel (%p1738) target = $region64
      $region63: #{stage_forward.4} parent=59 // pred_region
        %s1741 = smul.u32 8, %s20
        %p1742 = scmp.lt.s32.totalorder %s1741, 15
        %s1743 = scalar_select %p1742, %s1741, 15
        %s1744 = smul.addr %s1743, 4
        %s1745 = scalar_lea.vmem %s8, %s1744
      $region64: #{stage_forward.4} parent=59 // pred_fallthru
        _
    $region60: #{stage_forward.4} parent=5 // pred_fallthru
      _
  $region6: #{stage_forward.4} parent=0 // loop_footer
    %s18 = sadd.s32 1, %s14
  $region7: #{stage_forward.4} parent=0 // loop_footer_branch
    %13 = sbr.rel target = $region3
  $region8: #{stage_forward.4} parent=0 // loop_exit
    _

</llo_original>
